<compile_context>
chip_gen: v6e
topology: v6e:2x2x1
jax: 0.10.0
libtpu: 0.0.40
codegen_flags: <defaults>
</compile_context>

<pallas_src>
import jax
import jax.numpy as jnp
import numpy as np
from jax import lax
from jax.experimental import pallas as pl
from jax.experimental.pallas import tpu as pltpu


# ----------------------------- Pallas kernel -----------------------------
def seizure_kernel(
    x_ref,          # (S*Bb, D)   time-major flattened input block (row = t*Bb + b)
    wproj_ref,      # (D, H)      input_proj Linear weight (transposed)
    wih_cat_ref,    # (H, 8*Hh)   [W_ih_fwd | W_ih_bwd], gate order i,f,g,o
    whh_cat_ref,    # (Hh, 8*Hh)  [W_hh_fwd | W_hh_bwd]
    wcls_ref,       # (H, C)      classifier Linear weight (transposed)
    slab_ref,       # (9, Wmax)   packed small params (see wrapper)
    out_ref,        # (Bb, C)
    gx_sc,          # scratch (S*Bb, 8*Hh)  x-driven gate pre-activations
    lstm_out_sc,    # scratch (S, Bb, H)    bidirectional LSTM outputs
):
    S, Bb, H = lstm_out_sc.shape
    Hh = whh_cat_ref.shape[0]
    G = 4 * Hh
    C = out_ref.shape[1]

    # ---- unpack the small-parameter slab (one DMA for all of them) ----
    bproj = slab_ref[0:1, 0:H]
    bn1_s = slab_ref[1:2, 0:H]
    bn1_b = slab_ref[2:3, 0:H]
    b_cat = slab_ref[3:4, 0:2 * G]
    watt  = slab_ref[4:5, 0:H]
    batt  = slab_ref[5, 0]
    bn2_s = slab_ref[6:7, 0:H]
    bn2_b = slab_ref[7:8, 0:H]
    bcls  = slab_ref[8:9, 0:C]

    # ---- input_proj: Linear -> BatchNorm1d(eval) -> ReLU -> Dropout(id) ----
    proj = jnp.maximum(
        (jnp.dot(x_ref[...], wproj_ref[...],
                 preferred_element_type=jnp.float32) + bproj)
        * bn1_s + bn1_b,
        0.0)                                                       # (S*Bb, H)

    # ---- precompute x @ W_ih (+ folded biases) for BOTH directions ----
    gx_sc[...] = (jnp.dot(proj, wih_cat_ref[...],
                          preferred_element_type=jnp.float32)
                  + b_cat)                                         # (S*Bb, 8*Hh)

    # recurrent weights resident in vregs across the loop
    whh = whh_cat_ref[...]                                         # (Hh, 8*Hh)

    # ---- fused bidirectional LSTM recurrence (PyTorch gate order i,f,g,o) ----
    # h_stk / c_stk: rows 0:Bb = forward direction, rows Bb:2*Bb = backward.
    def step(t, carry):
        h_stk, c_stk = carry
        tr = S - 1 - t
        rf = pl.multiple_of(t * Bb, Bb)                            # Bb-row aligned
        rb = pl.multiple_of(tr * Bb, Bb)
        gxf = gx_sc[pl.ds(rf, Bb), 0:G]                            # (Bb, 4*Hh)
        gxb = gx_sc[pl.ds(rb, Bb), G:2 * G]                        # (Bb, 4*Hh)
        # ONE MXU push for both directions: (2*Bb, Hh) @ (Hh, 8*Hh)
        rec = jnp.dot(h_stk, whh, preferred_element_type=jnp.float32)
        gates = jnp.concatenate(
            [gxf + rec[0:Bb, 0:G],
             gxb + rec[Bb:2 * Bb, G:2 * G]], axis=0)               # (2*Bb, 4*Hh)
        # one sigmoid + one tanh over the stacked gates, then cheap slices
        sig = jax.nn.sigmoid(gates)
        tnh = jnp.tanh(gates)
        c_stk = (sig[:, Hh:2 * Hh] * c_stk
                 + sig[:, 0:Hh] * tnh[:, 2 * Hh:3 * Hh])
        h_stk = sig[:, 3 * Hh:4 * Hh] * jnp.tanh(c_stk)
        lstm_out_sc[t, :, 0:Hh] = h_stk[0:Bb]                      # fwd half
        lstm_out_sc[tr, :, Hh:H] = h_stk[Bb:2 * Bb]                # bwd half
        return h_stk, c_stk

    z = jnp.zeros((2 * Bb, Hh), jnp.float32)
    lax.fori_loop(0, S, step, (z, z), unroll=(S if S <= 16 else 8))

    # ---- attention over the time axis + weighted pooling ----
    lstm_out = lstm_out_sc[...]                                    # (S, Bb, H)
    scores = (jnp.sum(lstm_out * watt, axis=-1, keepdims=True)
              + batt)                                              # (S, Bb, 1)
    m = jnp.max(scores, axis=0, keepdims=True)
    e = jnp.exp(scores - m)
    attn = e * pl.reciprocal(jnp.sum(e, axis=0, keepdims=True), approx=True)
    ctx = jnp.sum(lstm_out * attn, axis=0)                         # (Bb, H)

    # ---- classifier: BatchNorm1d(eval) -> Dropout(id) -> Linear ----
    y = ctx * bn2_s + bn2_b
    out_ref[...] = (jnp.dot(y, wcls_ref[...],
                            preferred_element_type=jnp.float32) + bcls)


# ------------------------------- wrapper ---------------------------------
def minimal_seizure_classifier(x, P):
    B, S, D = x.shape
    H = P["wproj"].shape[1]
    Hh = P["whh_f"].shape[0]
    C = P["wcls"].shape[1]
    G = 4 * Hh

    # ---- pad batch to the 8-sublane quantum and block it over the grid ----
    B_BLK = min(64, ((B + 7) // 8) * 8)
    nb = -(-B // B_BLK)
    B_pad = nb * B_BLK

    x_tm = jnp.transpose(x, (1, 0, 2))                             # (S, B, D)
    if B_pad != B:
        x_tm = jnp.pad(x_tm, ((0, 0), (0, B_pad - B), (0, 0)))
    # (nb, S*B_BLK, D): one flattened time-major slab per batch block
    x_blk = (x_tm.reshape(S, nb, B_BLK, D).transpose(1, 0, 2, 3)
                 .reshape(nb, S * B_BLK, D))

    # ---- weight prep: concat W_ih; side-by-side W_hh for the fused matmul ----
    wih_cat = jnp.concatenate([P["wih_f"], P["wih_b"]], axis=1)    # (H, 8*Hh)
    whh_cat = jnp.concatenate([P["whh_f"], P["whh_b"]], axis=1)    # (Hh, 8*Hh)

    # ---- pack the nine small vectors into one slab (one DMA) ----
    Wmax = max(2 * G, H, C, 128)

    def row(v):
        v = jnp.asarray(v, jnp.float32).reshape(1, -1)
        return jnp.pad(v, ((0, 0), (0, Wmax - v.shape[1])))

    slab = jnp.concatenate([
        row(P["bproj"]), row(P["bn1_scale"]), row(P["bn1_shift"]),
        row(jnp.concatenate([P["b_f"], P["b_b"]], axis=1)),
        row(P["watt"]), row(P["batt"]),
        row(P["bn2_scale"]), row(P["bn2_shift"]), row(P["bcls"]),
    ], axis=0)                                                     # (9, Wmax)

    args = [x_blk, P["wproj"], wih_cat, whh_cat, P["wcls"], slab]

    def wspec(shape):
        nd = len(shape)
        return pl.BlockSpec(shape, lambda b, nd=nd: (0,) * nd)

    in_specs = ([pl.BlockSpec((None, S * B_BLK, D), lambda b: (b, 0, 0))]
                + [wspec(a.shape) for a in args[1:]])

    # VMEM-scaling guard: gx + lstm_out scratch grow with S*B_BLK (v7x has
    # 64 MiB physical / 32 MiB default scoped VMEM).
    est_vmem = 4 * (2 * S * B_BLK * D + S * B_BLK * (2 * G + H)
                    + D * H + H * 2 * G + Hh * 2 * G + H * C + int(slab.size))
    cp_kwargs = dict(dimension_semantics=("parallel",))
    if est_vmem > 24 * (1 << 20):
        cp_kwargs["vmem_limit_bytes"] = int(min(2 * est_vmem, 96 * (1 << 20)))

    out = pl.pallas_call(
        seizure_kernel,
        out_shape=jax.ShapeDtypeStruct((B_pad, C), jnp.float32),
        grid=(nb,),
        in_specs=in_specs,
        out_specs=pl.BlockSpec((B_BLK, C), lambda b: (b, 0)),
        scratch_shapes=[
            pltpu.VMEM((S * B_BLK, 2 * G), jnp.float32),
            pltpu.VMEM((S, B_BLK, H), jnp.float32),
        ],
        compiler_params=pltpu.CompilerParams(**cp_kwargs),
    )(*args)
    return out[:B]


# --------------------------- pure-JAX reference ---------------------------
def reference(x, P):
    B, S, D = x.shape
    H = P["wproj"].shape[1]
    Hh = P["whh_f"].shape[0]
    p = jnp.maximum(
        (x.reshape(B * S, D) @ P["wproj"] + P["bproj"]) * P["bn1_scale"]
        + P["bn1_shift"], 0.0).reshape(B, S, H)
    p_tm = jnp.transpose(p, (1, 0, 2))                    # (S, B, H)

    def make_step(wih, whh, b):
        def step(carry, xt):
            h, c = carry
            gates = xt @ wih + h @ whh + b
            i, f, g, o = jnp.split(gates, 4, axis=-1)
            c = jax.nn.sigmoid(f) * c + jax.nn.sigmoid(i) * jnp.tanh(g)
            h = jax.nn.sigmoid(o) * jnp.tanh(c)
            return (h, c), h
        return step

    init = (jnp.zeros((B, Hh), jnp.float32), jnp.zeros((B, Hh), jnp.float32))
    _, hf = lax.scan(make_step(P["wih_f"], P["whh_f"], P["b_f"]), init, p_tm)
    _, hb = lax.scan(make_step(P["wih_b"], P["whh_b"], P["b_b"]), init, p_tm[::-1])
    hb = hb[::-1]
    lstm_out = jnp.concatenate([hf, hb], axis=-1)         # (S, B, H)
    scores = jnp.sum(lstm_out * P["watt"], axis=-1, keepdims=True) + P["batt"][0, 0]
    attn = jax.nn.softmax(scores, axis=0)
    ctx = jnp.sum(lstm_out * attn, axis=0)
    y = ctx * P["bn2_scale"] + P["bn2_shift"]
    return y @ P["wcls"] + P["bcls"]


# ---------------------------- parameter init ------------------------------
def init_params(key, D, H, C):
    Hh = H // 2
    eps = 1e-5
    ks = jax.random.split(key, 12)

    def xavier(k, shape):          # shape = (fan_in, fan_out)
        bound = (6.0 / (shape[0] + shape[1])) ** 0.5
        return jax.random.uniform(k, shape, jnp.float32, -bound, bound)

    def lstm_u(k, shape):
        bound = 1.0 / (Hh ** 0.5)
        return jax.random.uniform(k, shape, jnp.float32, -bound, bound)

    # eval-mode BatchNorm with freshly initialized running stats (mean=0, var=1)
    bn_scale = (jnp.ones((1, H)) / jnp.sqrt(1.0 + eps)).astype(jnp.float32)
    bn_shift = jnp.zeros((1, H), jnp.float32)

    return dict(
        wproj=xavier(ks[0], (D, H)),
        bproj=jnp.zeros((1, H), jnp.float32),
        bn1_scale=bn_scale, bn1_shift=bn_shift,
        wih_f=lstm_u(ks[1], (H, 4 * Hh)),
        whh_f=lstm_u(ks[2], (Hh, 4 * Hh)),
        b_f=lstm_u(ks[3], (1, 4 * Hh)) + lstm_u(ks[4], (1, 4 * Hh)),
        wih_b=lstm_u(ks[5], (H, 4 * Hh)),
        whh_b=lstm_u(ks[6], (Hh, 4 * Hh)),
        b_b=lstm_u(ks[7], (1, 4 * Hh)) + lstm_u(ks[8], (1, 4 * Hh)),
        watt=xavier(ks[9], (1, H)),           # Linear(H, 1) weight as a row
        batt=jnp.zeros((1, 1), jnp.float32),
        bn2_scale=bn_scale, bn2_shift=bn_shift,
        wcls=xavier(ks[10], (H, C)),
        bcls=jnp.zeros((1, C), jnp.float32),
    )


if __name__ == "__main__":
    B, S, D, H, C = 4, 8, 128, 64, 2    # batch, seq_len, input_dim, hidden_dim, classes

    key = jax.random.PRNGKey(0)
    kx, kp = jax.random.split(key)
    x = jax.random.normal(kx, (B, S, D), jnp.float32)
    params = init_params(kp, D, H, C)

    logits = jax.block_until_ready(minimal_seizure_classifier(x, params))
    ref = jax.block_until_ready(reference(x, params))

    assert logits.shape == (B, C)
    assert np.all(np.isfinite(np.asarray(logits)))
    # atol loosened slightly vs. v2 for the approx-reciprocal softmax normalization.
    np.testing.assert_allclose(np.asarray(logits), np.asarray(ref),
                               rtol=1e-3, atol=5e-4)
    print("KERNEL_OK")
</pallas_src>

<mosaic_0001>
module attributes {stable_mosaic.version = 11 : i64} {
  func.func @seizure_kernel(%arg0: i32, %arg1: memref<1x64x128xf32, #tpu.memory_space<vmem>>, %arg2: memref<128x64xf32, #tpu.memory_space<vmem>>, %arg3: memref<64x256xf32, #tpu.memory_space<vmem>>, %arg4: memref<32x256xf32, #tpu.memory_space<vmem>>, %arg5: memref<64x2xf32, #tpu.memory_space<vmem>>, %arg6: memref<9x256xf32, #tpu.memory_space<vmem>>, %arg7: memref<8x2xf32, #tpu.memory_space<vmem>>, %arg8: memref<64x256xf32, #tpu.memory_space<vmem>>, %arg9: memref<8x8x64xf32, #tpu.memory_space<vmem>>) attributes {dimension_semantics = [#tpu.dimension_semantics<parallel>], iteration_bounds = array<i64: 1>, scalar_prefetch = 0 : i64, scratch_operands = 2 : i64, tpu.core_type = #tpu.core_type<tc>, window_params = [{transform_indices = @transform_0, window_bounds = array<i64: 1, 64, 128>}, {pipeline_mode = #tpu.pipeline_mode<synchronous>, transform_indices = @transform_1, window_bounds = array<i64: 128, 64>}, {pipeline_mode = #tpu.pipeline_mode<synchronous>, transform_indices = @transform_2, window_bounds = array<i64: 64, 256>}, {pipeline_mode = #tpu.pipeline_mode<synchronous>, transform_indices = @transform_3, window_bounds = array<i64: 32, 256>}, {pipeline_mode = #tpu.pipeline_mode<synchronous>, transform_indices = @transform_4, window_bounds = array<i64: 64, 2>}, {pipeline_mode = #tpu.pipeline_mode<synchronous>, transform_indices = @transform_5, window_bounds = array<i64: 9, 256>}, {transform_indices = @transform_6, window_bounds = array<i64: 8, 2>}]} {
    %c0 = arith.constant 0 : index
    %c0_0 = arith.constant 0 : index
    %0 = vector.load %arg6[%c0, %c0_0] : memref<9x256xf32, #tpu.memory_space<vmem>>, vector<1x64xf32>
    %c1 = arith.constant 1 : index
    %c0_1 = arith.constant 0 : index
    %1 = vector.load %arg6[%c1, %c0_1] : memref<9x256xf32, #tpu.memory_space<vmem>>, vector<1x64xf32>
    %c2 = arith.constant 2 : index
    %c0_2 = arith.constant 0 : index
    %2 = vector.load %arg6[%c2, %c0_2] : memref<9x256xf32, #tpu.memory_space<vmem>>, vector<1x64xf32>
    %c3 = arith.constant 3 : index
    %c0_3 = arith.constant 0 : index
    %3 = vector.load %arg6[%c3, %c0_3] : memref<9x256xf32, #tpu.memory_space<vmem>>, vector<1x256xf32>
    %c4 = arith.constant 4 : index
    %c0_4 = arith.constant 0 : index
    %4 = vector.load %arg6[%c4, %c0_4] : memref<9x256xf32, #tpu.memory_space<vmem>>, vector<1x64xf32>
    %c5 = arith.constant 5 : index
    %c0_5 = arith.constant 0 : index
    %5 = vector.load %arg6[%c5, %c0_5] : memref<9x256xf32, #tpu.memory_space<vmem>>, vector<1x1xf32>
    %6 = vector.extract %5[0, 0] : f32 from vector<1x1xf32>
    %c6 = arith.constant 6 : index
    %c0_6 = arith.constant 0 : index
    %7 = vector.load %arg6[%c6, %c0_6] : memref<9x256xf32, #tpu.memory_space<vmem>>, vector<1x64xf32>
    %c7 = arith.constant 7 : index
    %c0_7 = arith.constant 0 : index
    %8 = vector.load %arg6[%c7, %c0_7] : memref<9x256xf32, #tpu.memory_space<vmem>>, vector<1x64xf32>
    %c8 = arith.constant 8 : index
    %c0_8 = arith.constant 0 : index
    %9 = vector.load %arg6[%c8, %c0_8] : memref<9x256xf32, #tpu.memory_space<vmem>>, vector<1x2xf32>
    %c0_9 = arith.constant 0 : index
    %c0_10 = arith.constant 0 : index
    %c0_11 = arith.constant 0 : index
    %10 = vector.load %arg1[%c0_9, %c0_10, %c0_11] : memref<1x64x128xf32, #tpu.memory_space<vmem>>, vector<1x64x128xf32>
    %11 = vector.shape_cast %10 : vector<1x64x128xf32> to vector<64x128xf32>
    %c0_12 = arith.constant 0 : index
    %c0_13 = arith.constant 0 : index
    %12 = vector.load %arg2[%c0_12, %c0_13] : memref<128x64xf32, #tpu.memory_space<vmem>>, vector<128x64xf32>
    %cst = arith.constant dense<0.000000e+00> : vector<64x64xf32>
    %13 = tpu.matmul %11, %12, %cst {dimension_numbers = #tpu.dot_dimension_numbers<[1], [0], [0], [1], [0, 0, 1, 1], [], []>} : vector<64x128xf32>, vector<128x64xf32>, vector<64x64xf32> -> vector<64x64xf32>
    %14 = vector.broadcast %0 : vector<1x64xf32> to vector<64x64xf32>
    %15 = arith.addf %13, %14 : vector<64x64xf32>
    %16 = vector.broadcast %1 : vector<1x64xf32> to vector<64x64xf32>
    %17 = arith.mulf %15, %16 : vector<64x64xf32>
    %18 = vector.broadcast %2 : vector<1x64xf32> to vector<64x64xf32>
    %19 = arith.addf %17, %18 : vector<64x64xf32>
    %cst_14 = arith.constant 0.000000e+00 : f32
    %20 = vector.broadcast %cst_14 : f32 to vector<64x64xf32>
    %21 = arith.maximumf %19, %20 : vector<64x64xf32>
    %c0_15 = arith.constant 0 : index
    %c0_16 = arith.constant 0 : index
    %22 = vector.load %arg3[%c0_15, %c0_16] : memref<64x256xf32, #tpu.memory_space<vmem>>, vector<64x256xf32>
    %cst_17 = arith.constant dense<0.000000e+00> : vector<64x256xf32>
    %23 = tpu.matmul %21, %22, %cst_17 {dimension_numbers = #tpu.dot_dimension_numbers<[1], [0], [0], [1], [0, 0, 1, 1], [], []>} : vector<64x64xf32>, vector<64x256xf32>, vector<64x256xf32> -> vector<64x256xf32>
    %24 = vector.broadcast %3 : vector<1x256xf32> to vector<64x256xf32>
    %25 = arith.addf %23, %24 : vector<64x256xf32>
    %c0_18 = arith.constant 0 : index
    %c0_19 = arith.constant 0 : index
    %26 = vector.load %arg8[%c0_18, %c0_19] : memref<64x256xf32, #tpu.memory_space<vmem>>, vector<64x256xf32>
    tpu.vector_store %arg8[%c0_18, %c0_19], %25 {strides = array<i32>} : memref<64x256xf32, #tpu.memory_space<vmem>>, vector<64x256xf32>,
    %c0_20 = arith.constant 0 : index
    %c0_21 = arith.constant 0 : index
    %27 = vector.load %arg4[%c0_20, %c0_21] : memref<32x256xf32, #tpu.memory_space<vmem>>, vector<32x256xf32>
    %cst_22 = arith.constant 0.000000e+00 : f32
    %28 = vector.broadcast %cst_22 : f32 to vector<16x32xf32>
    %c0_i32 = arith.constant 0 : i32
    %c7_i32 = arith.constant 7 : i32
    %29 = arith.subi %c7_i32, %c0_i32 : i32
    %c8_i32 = arith.constant 8 : i32
    %30 = arith.muli %c0_i32, %c8_i32 : i32
    %31 = tpu.assume_multiple %30, 8 : i32
    %c8_i32_23 = arith.constant 8 : i32
    %32 = arith.muli %29, %c8_i32_23 : i32
    %33 = tpu.assume_multiple %32, 8 : i32
    %34 = arith.index_cast %31 : i32 to index
    %c0_24 = arith.constant 0 : index
    %35 = vector.load %arg8[%34, %c0_24] : memref<64x256xf32, #tpu.memory_space<vmem>>, vector<8x128xf32>
    %36 = arith.index_cast %33 : i32 to index
    %c128 = arith.constant 128 : index
    %37 = vector.load %arg8[%36, %c128] : memref<64x256xf32, #tpu.memory_space<vmem>>, vector<8x128xf32>
    %cst_25 = arith.constant dense<0.000000e+00> : vector<16x256xf32>
    %38 = tpu.matmul %28, %27, %cst_25 {dimension_numbers = #tpu.dot_dimension_numbers<[1], [0], [0], [1], [0, 0, 1, 1], [], []>} : vector<16x32xf32>, vector<32x256xf32>, vector<16x256xf32> -> vector<16x256xf32>
    %39 = vector.extract_strided_slice %38 {offsets = [0, 0], sizes = [8, 128], strides = [1, 1]} : vector<16x256xf32> to vector<8x128xf32>
    %40 = arith.addf %35, %39 : vector<8x128xf32>
    %41 = vector.extract_strided_slice %38 {offsets = [8, 128], sizes = [8, 128], strides = [1, 1]} : vector<16x256xf32> to vector<8x128xf32>
    %42 = arith.addf %37, %41 : vector<8x128xf32>
    %43 = tpu.concatenate %40, %42 in 0 : vector<8x128xf32>, vector<8x128xf32> -> vector<16x128xf32>
    %44 = arith.negf %43 : vector<16x128xf32>
    %45 = math.exp %44 : vector<16x128xf32>
    %cst_26 = arith.constant 1.000000e+00 : f32
    %46 = vector.broadcast %cst_26 : f32 to vector<16x128xf32>
    %47 = arith.addf %46, %45 : vector<16x128xf32>
    %48 = arith.divf %46, %47 : vector<16x128xf32>
    %49 = math.tanh %43 : vector<16x128xf32>
    %50 = vector.extract_strided_slice %48 {offsets = [0, 32], sizes = [16, 32], strides = [1, 1]} : vector<16x128xf32> to vector<16x32xf32>
    %51 = arith.mulf %50, %28 : vector<16x32xf32>
    %52 = vector.extract_strided_slice %48 {offsets = [0, 0], sizes = [16, 32], strides = [1, 1]} : vector<16x128xf32> to vector<16x32xf32>
    %53 = vector.extract_strided_slice %49 {offsets = [0, 64], sizes = [16, 32], strides = [1, 1]} : vector<16x128xf32> to vector<16x32xf32>
    %54 = arith.mulf %52, %53 : vector<16x32xf32>
    %55 = arith.addf %51, %54 : vector<16x32xf32>
    %56 = vector.extract_strided_slice %48 {offsets = [0, 96], sizes = [16, 32], strides = [1, 1]} : vector<16x128xf32> to vector<16x32xf32>
    %57 = math.tanh %55 : vector<16x32xf32>
    %58 = arith.mulf %56, %57 : vector<16x32xf32>
    %59 = vector.extract_strided_slice %58 {offsets = [0, 0], sizes = [8, 32], strides = [1, 1]} : vector<16x32xf32> to vector<8x32xf32>
    %60 = arith.index_cast %c0_i32 : i32 to index
    %c0_27 = arith.constant 0 : index
    %c0_28 = arith.constant 0 : index
    %61 = vector.load %arg9[%60, %c0_27, %c0_28] : memref<8x8x64xf32, #tpu.memory_space<vmem>>, vector<1x8x32xf32>
    %62 = vector.shape_cast %61 : vector<1x8x32xf32> to vector<8x32xf32>
    %63 = vector.shape_cast %59 : vector<8x32xf32> to vector<1x8x32xf32>
    tpu.vector_store %arg9[%60, %c0_27, %c0_28], %63 {strides = array<i32>} : memref<8x8x64xf32, #tpu.memory_space<vmem>>, vector<1x8x32xf32>,
    %64 = vector.extract_strided_slice %58 {offsets = [8, 0], sizes = [8, 32], strides = [1, 1]} : vector<16x32xf32> to vector<8x32xf32>
    %65 = arith.index_cast %29 : i32 to index
    %c0_29 = arith.constant 0 : index
    %c32 = arith.constant 32 : index
    %66 = vector.load %arg9[%65, %c0_29, %c32] : memref<8x8x64xf32, #tpu.memory_space<vmem>>, vector<1x8x32xf32>
    %67 = vector.shape_cast %66 : vector<1x8x32xf32> to vector<8x32xf32>
    %68 = vector.shape_cast %64 : vector<8x32xf32> to vector<1x8x32xf32>
    tpu.vector_store %arg9[%65, %c0_29, %c32], %68 {strides = array<i32>} : memref<8x8x64xf32, #tpu.memory_space<vmem>>, vector<1x8x32xf32>,
    %c1_i32 = arith.constant 1 : i32
    %c7_i32_30 = arith.constant 7 : i32
    %69 = arith.subi %c7_i32_30, %c1_i32 : i32
    %c8_i32_31 = arith.constant 8 : i32
    %70 = arith.muli %c1_i32, %c8_i32_31 : i32
    %71 = tpu.assume_multiple %70, 8 : i32
    %c8_i32_32 = arith.constant 8 : i32
    %72 = arith.muli %69, %c8_i32_32 : i32
    %73 = tpu.assume_multiple %72, 8 : i32
    %74 = arith.index_cast %71 : i32 to index
    %c0_33 = arith.constant 0 : index
    %75 = vector.load %arg8[%74, %c0_33] : memref<64x256xf32, #tpu.memory_space<vmem>>, vector<8x128xf32>
    %76 = arith.index_cast %73 : i32 to index
    %c128_34 = arith.constant 128 : index
    %77 = vector.load %arg8[%76, %c128_34] : memref<64x256xf32, #tpu.memory_space<vmem>>, vector<8x128xf32>
    %cst_35 = arith.constant dense<0.000000e+00> : vector<16x256xf32>
    %78 = tpu.matmul %58, %27, %cst_35 {dimension_numbers = #tpu.dot_dimension_numbers<[1], [0], [0], [1], [0, 0, 1, 1], [], []>} : vector<16x32xf32>, vector<32x256xf32>, vector<16x256xf32> -> vector<16x256xf32>
    %79 = vector.extract_strided_slice %78 {offsets = [0, 0], sizes = [8, 128], strides = [1, 1]} : vector<16x256xf32> to vector<8x128xf32>
    %80 = arith.addf %75, %79 : vector<8x128xf32>
    %81 = vector.extract_strided_slice %78 {offsets = [8, 128], sizes = [8, 128], strides = [1, 1]} : vector<16x256xf32> to vector<8x128xf32>
    %82 = arith.addf %77, %81 : vector<8x128xf32>
    %83 = tpu.concatenate %80, %82 in 0 : vector<8x128xf32>, vector<8x128xf32> -> vector<16x128xf32>
    %84 = arith.negf %83 : vector<16x128xf32>
    %85 = math.exp %84 : vector<16x128xf32>
    %cst_36 = arith.constant 1.000000e+00 : f32
    %86 = vector.broadcast %cst_36 : f32 to vector<16x128xf32>
    %87 = arith.addf %86, %85 : vector<16x128xf32>
    %88 = arith.divf %86, %87 : vector<16x128xf32>
    %89 = math.tanh %83 : vector<16x128xf32>
    %90 = vector.extract_strided_slice %88 {offsets = [0, 32], sizes = [16, 32], strides = [1, 1]} : vector<16x128xf32> to vector<16x32xf32>
    %91 = arith.mulf %90, %55 : vector<16x32xf32>
    %92 = vector.extract_strided_slice %88 {offsets = [0, 0], sizes = [16, 32], strides = [1, 1]} : vector<16x128xf32> to vector<16x32xf32>
    %93 = vector.extract_strided_slice %89 {offsets = [0, 64], sizes = [16, 32], strides = [1, 1]} : vector<16x128xf32> to vector<16x32xf32>
    %94 = arith.mulf %92, %93 : vector<16x32xf32>
    %95 = arith.addf %91, %94 : vector<16x32xf32>
    %96 = vector.extract_strided_slice %88 {offsets = [0, 96], sizes = [16, 32], strides = [1, 1]} : vector<16x128xf32> to vector<16x32xf32>
    %97 = math.tanh %95 : vector<16x32xf32>
    %98 = arith.mulf %96, %97 : vector<16x32xf32>
    %99 = vector.extract_strided_slice %98 {offsets = [0, 0], sizes = [8, 32], strides = [1, 1]} : vector<16x32xf32> to vector<8x32xf32>
    %100 = arith.index_cast %c1_i32 : i32 to index
    %c0_37 = arith.constant 0 : index
    %c0_38 = arith.constant 0 : index
    %101 = vector.load %arg9[%100, %c0_37, %c0_38] : memref<8x8x64xf32, #tpu.memory_space<vmem>>, vector<1x8x32xf32>
    %102 = vector.shape_cast %101 : vector<1x8x32xf32> to vector<8x32xf32>
    %103 = vector.shape_cast %99 : vector<8x32xf32> to vector<1x8x32xf32>
    tpu.vector_store %arg9[%100, %c0_37, %c0_38], %103 {strides = array<i32>} : memref<8x8x64xf32, #tpu.memory_space<vmem>>, vector<1x8x32xf32>,
    %104 = vector.extract_strided_slice %98 {offsets = [8, 0], sizes = [8, 32], strides = [1, 1]} : vector<16x32xf32> to vector<8x32xf32>
    %105 = arith.index_cast %69 : i32 to index
    %c0_39 = arith.constant 0 : index
    %c32_40 = arith.constant 32 : index
    %106 = vector.load %arg9[%105, %c0_39, %c32_40] : memref<8x8x64xf32, #tpu.memory_space<vmem>>, vector<1x8x32xf32>
    %107 = vector.shape_cast %106 : vector<1x8x32xf32> to vector<8x32xf32>
    %108 = vector.shape_cast %104 : vector<8x32xf32> to vector<1x8x32xf32>
    tpu.vector_store %arg9[%105, %c0_39, %c32_40], %108 {strides = array<i32>} : memref<8x8x64xf32, #tpu.memory_space<vmem>>, vector<1x8x32xf32>,
    %c2_i32 = arith.constant 2 : i32
    %c7_i32_41 = arith.constant 7 : i32
    %109 = arith.subi %c7_i32_41, %c2_i32 : i32
    %c8_i32_42 = arith.constant 8 : i32
    %110 = arith.muli %c2_i32, %c8_i32_42 : i32
    %111 = tpu.assume_multiple %110, 8 : i32
    %c8_i32_43 = arith.constant 8 : i32
    %112 = arith.muli %109, %c8_i32_43 : i32
    %113 = tpu.assume_multiple %112, 8 : i32
    %114 = arith.index_cast %111 : i32 to index
    %c0_44 = arith.constant 0 : index
    %115 = vector.load %arg8[%114, %c0_44] : memref<64x256xf32, #tpu.memory_space<vmem>>, vector<8x128xf32>
    %116 = arith.index_cast %113 : i32 to index
    %c128_45 = arith.constant 128 : index
    %117 = vector.load %arg8[%116, %c128_45] : memref<64x256xf32, #tpu.memory_space<vmem>>, vector<8x128xf32>
    %cst_46 = arith.constant dense<0.000000e+00> : vector<16x256xf32>
    %118 = tpu.matmul %98, %27, %cst_46 {dimension_numbers = #tpu.dot_dimension_numbers<[1], [0], [0], [1], [0, 0, 1, 1], [], []>} : vector<16x32xf32>, vector<32x256xf32>, vector<16x256xf32> -> vector<16x256xf32>
    %119 = vector.extract_strided_slice %118 {offsets = [0, 0], sizes = [8, 128], strides = [1, 1]} : vector<16x256xf32> to vector<8x128xf32>
    %120 = arith.addf %115, %119 : vector<8x128xf32>
    %121 = vector.extract_strided_slice %118 {offsets = [8, 128], sizes = [8, 128], strides = [1, 1]} : vector<16x256xf32> to vector<8x128xf32>
    %122 = arith.addf %117, %121 : vector<8x128xf32>
    %123 = tpu.concatenate %120, %122 in 0 : vector<8x128xf32>, vector<8x128xf32> -> vector<16x128xf32>
    %124 = arith.negf %123 : vector<16x128xf32>
    %125 = math.exp %124 : vector<16x128xf32>
    %cst_47 = arith.constant 1.000000e+00 : f32
    %126 = vector.broadcast %cst_47 : f32 to vector<16x128xf32>
    %127 = arith.addf %126, %125 : vector<16x128xf32>
    %128 = arith.divf %126, %127 : vector<16x128xf32>
    %129 = math.tanh %123 : vector<16x128xf32>
    %130 = vector.extract_strided_slice %128 {offsets = [0, 32], sizes = [16, 32], strides = [1, 1]} : vector<16x128xf32> to vector<16x32xf32>
    %131 = arith.mulf %130, %95 : vector<16x32xf32>
    %132 = vector.extract_strided_slice %128 {offsets = [0, 0], sizes = [16, 32], strides = [1, 1]} : vector<16x128xf32> to vector<16x32xf32>
    %133 = vector.extract_strided_slice %129 {offsets = [0, 64], sizes = [16, 32], strides = [1, 1]} : vector<16x128xf32> to vector<16x32xf32>
    %134 = arith.mulf %132, %133 : vector<16x32xf32>
    %135 = arith.addf %131, %134 : vector<16x32xf32>
    %136 = vector.extract_strided_slice %128 {offsets = [0, 96], sizes = [16, 32], strides = [1, 1]} : vector<16x128xf32> to vector<16x32xf32>
    %137 = math.tanh %135 : vector<16x32xf32>
    %138 = arith.mulf %136, %137 : vector<16x32xf32>
    %139 = vector.extract_strided_slice %138 {offsets = [0, 0], sizes = [8, 32], strides = [1, 1]} : vector<16x32xf32> to vector<8x32xf32>
    %140 = arith.index_cast %c2_i32 : i32 to index
    %c0_48 = arith.constant 0 : index
    %c0_49 = arith.constant 0 : index
    %141 = vector.load %arg9[%140, %c0_48, %c0_49] : memref<8x8x64xf32, #tpu.memory_space<vmem>>, vector<1x8x32xf32>
    %142 = vector.shape_cast %141 : vector<1x8x32xf32> to vector<8x32xf32>
    %143 = vector.shape_cast %139 : vector<8x32xf32> to vector<1x8x32xf32>
    tpu.vector_store %arg9[%140, %c0_48, %c0_49], %143 {strides = array<i32>} : memref<8x8x64xf32, #tpu.memory_space<vmem>>, vector<1x8x32xf32>,
    %144 = vector.extract_strided_slice %138 {offsets = [8, 0], sizes = [8, 32], strides = [1, 1]} : vector<16x32xf32> to vector<8x32xf32>
    %145 = arith.index_cast %109 : i32 to index
    %c0_50 = arith.constant 0 : index
    %c32_51 = arith.constant 32 : index
    %146 = vector.load %arg9[%145, %c0_50, %c32_51] : memref<8x8x64xf32, #tpu.memory_space<vmem>>, vector<1x8x32xf32>
    %147 = vector.shape_cast %146 : vector<1x8x32xf32> to vector<8x32xf32>
    %148 = vector.shape_cast %144 : vector<8x32xf32> to vector<1x8x32xf32>
    tpu.vector_store %arg9[%145, %c0_50, %c32_51], %148 {strides = array<i32>} : memref<8x8x64xf32, #tpu.memory_space<vmem>>, vector<1x8x32xf32>,
    %c3_i32 = arith.constant 3 : i32
    %c7_i32_52 = arith.constant 7 : i32
    %149 = arith.subi %c7_i32_52, %c3_i32 : i32
    %c8_i32_53 = arith.constant 8 : i32
    %150 = arith.muli %c3_i32, %c8_i32_53 : i32
    %151 = tpu.assume_multiple %150, 8 : i32
    %c8_i32_54 = arith.constant 8 : i32
    %152 = arith.muli %149, %c8_i32_54 : i32
    %153 = tpu.assume_multiple %152, 8 : i32
    %154 = arith.index_cast %151 : i32 to index
    %c0_55 = arith.constant 0 : index
    %155 = vector.load %arg8[%154, %c0_55] : memref<64x256xf32, #tpu.memory_space<vmem>>, vector<8x128xf32>
    %156 = arith.index_cast %153 : i32 to index
    %c128_56 = arith.constant 128 : index
    %157 = vector.load %arg8[%156, %c128_56] : memref<64x256xf32, #tpu.memory_space<vmem>>, vector<8x128xf32>
    %cst_57 = arith.constant dense<0.000000e+00> : vector<16x256xf32>
    %158 = tpu.matmul %138, %27, %cst_57 {dimension_numbers = #tpu.dot_dimension_numbers<[1], [0], [0], [1], [0, 0, 1, 1], [], []>} : vector<16x32xf32>, vector<32x256xf32>, vector<16x256xf32> -> vector<16x256xf32>
    %159 = vector.extract_strided_slice %158 {offsets = [0, 0], sizes = [8, 128], strides = [1, 1]} : vector<16x256xf32> to vector<8x128xf32>
    %160 = arith.addf %155, %159 : vector<8x128xf32>
    %161 = vector.extract_strided_slice %158 {offsets = [8, 128], sizes = [8, 128], strides = [1, 1]} : vector<16x256xf32> to vector<8x128xf32>
    %162 = arith.addf %157, %161 : vector<8x128xf32>
    %163 = tpu.concatenate %160, %162 in 0 : vector<8x128xf32>, vector<8x128xf32> -> vector<16x128xf32>
    %164 = arith.negf %163 : vector<16x128xf32>
    %165 = math.exp %164 : vector<16x128xf32>
    %cst_58 = arith.constant 1.000000e+00 : f32
    %166 = vector.broadcast %cst_58 : f32 to vector<16x128xf32>
    %167 = arith.addf %166, %165 : vector<16x128xf32>
    %168 = arith.divf %166, %167 : vector<16x128xf32>
    %169 = math.tanh %163 : vector<16x128xf32>
    %170 = vector.extract_strided_slice %168 {offsets = [0, 32], sizes = [16, 32], strides = [1, 1]} : vector<16x128xf32> to vector<16x32xf32>
    %171 = arith.mulf %170, %135 : vector<16x32xf32>
    %172 = vector.extract_strided_slice %168 {offsets = [0, 0], sizes = [16, 32], strides = [1, 1]} : vector<16x128xf32> to vector<16x32xf32>
    %173 = vector.extract_strided_slice %169 {offsets = [0, 64], sizes = [16, 32], strides = [1, 1]} : vector<16x128xf32> to vector<16x32xf32>
    %174 = arith.mulf %172, %173 : vector<16x32xf32>
    %175 = arith.addf %171, %174 : vector<16x32xf32>
    %176 = vector.extract_strided_slice %168 {offsets = [0, 96], sizes = [16, 32], strides = [1, 1]} : vector<16x128xf32> to vector<16x32xf32>
    %177 = math.tanh %175 : vector<16x32xf32>
    %178 = arith.mulf %176, %177 : vector<16x32xf32>
    %179 = vector.extract_strided_slice %178 {offsets = [0, 0], sizes = [8, 32], strides = [1, 1]} : vector<16x32xf32> to vector<8x32xf32>
    %180 = arith.index_cast %c3_i32 : i32 to index
    %c0_59 = arith.constant 0 : index
    %c0_60 = arith.constant 0 : index
    %181 = vector.load %arg9[%180, %c0_59, %c0_60] : memref<8x8x64xf32, #tpu.memory_space<vmem>>, vector<1x8x32xf32>
    %182 = vector.shape_cast %181 : vector<1x8x32xf32> to vector<8x32xf32>
    %183 = vector.shape_cast %179 : vector<8x32xf32> to vector<1x8x32xf32>
    tpu.vector_store %arg9[%180, %c0_59, %c0_60], %183 {strides = array<i32>} : memref<8x8x64xf32, #tpu.memory_space<vmem>>, vector<1x8x32xf32>,
    %184 = vector.extract_strided_slice %178 {offsets = [8, 0], sizes = [8, 32], strides = [1, 1]} : vector<16x32xf32> to vector<8x32xf32>
    %185 = arith.index_cast %149 : i32 to index
    %c0_61 = arith.constant 0 : index
    %c32_62 = arith.constant 32 : index
    %186 = vector.load %arg9[%185, %c0_61, %c32_62] : memref<8x8x64xf32, #tpu.memory_space<vmem>>, vector<1x8x32xf32>
    %187 = vector.shape_cast %186 : vector<1x8x32xf32> to vector<8x32xf32>
    %188 = vector.shape_cast %184 : vector<8x32xf32> to vector<1x8x32xf32>
    tpu.vector_store %arg9[%185, %c0_61, %c32_62], %188 {strides = array<i32>} : memref<8x8x64xf32, #tpu.memory_space<vmem>>, vector<1x8x32xf32>,
    %c4_i32 = arith.constant 4 : i32
    %c7_i32_63 = arith.constant 7 : i32
    %189 = arith.subi %c7_i32_63, %c4_i32 : i32
    %c8_i32_64 = arith.constant 8 : i32
    %190 = arith.muli %c4_i32, %c8_i32_64 : i32
    %191 = tpu.assume_multiple %190, 8 : i32
    %c8_i32_65 = arith.constant 8 : i32
    %192 = arith.muli %189, %c8_i32_65 : i32
    %193 = tpu.assume_multiple %192, 8 : i32
    %194 = arith.index_cast %191 : i32 to index
    %c0_66 = arith.constant 0 : index
    %195 = vector.load %arg8[%194, %c0_66] : memref<64x256xf32, #tpu.memory_space<vmem>>, vector<8x128xf32>
    %196 = arith.index_cast %193 : i32 to index
    %c128_67 = arith.constant 128 : index
    %197 = vector.load %arg8[%196, %c128_67] : memref<64x256xf32, #tpu.memory_space<vmem>>, vector<8x128xf32>
    %cst_68 = arith.constant dense<0.000000e+00> : vector<16x256xf32>
    %198 = tpu.matmul %178, %27, %cst_68 {dimension_numbers = #tpu.dot_dimension_numbers<[1], [0], [0], [1], [0, 0, 1, 1], [], []>} : vector<16x32xf32>, vector<32x256xf32>, vector<16x256xf32> -> vector<16x256xf32>
    %199 = vector.extract_strided_slice %198 {offsets = [0, 0], sizes = [8, 128], strides = [1, 1]} : vector<16x256xf32> to vector<8x128xf32>
    %200 = arith.addf %195, %199 : vector<8x128xf32>
    %201 = vector.extract_strided_slice %198 {offsets = [8, 128], sizes = [8, 128], strides = [1, 1]} : vector<16x256xf32> to vector<8x128xf32>
    %202 = arith.addf %197, %201 : vector<8x128xf32>
    %203 = tpu.concatenate %200, %202 in 0 : vector<8x128xf32>, vector<8x128xf32> -> vector<16x128xf32>
    %204 = arith.negf %203 : vector<16x128xf32>
    %205 = math.exp %204 : vector<16x128xf32>
    %cst_69 = arith.constant 1.000000e+00 : f32
    %206 = vector.broadcast %cst_69 : f32 to vector<16x128xf32>
    %207 = arith.addf %206, %205 : vector<16x128xf32>
    %208 = arith.divf %206, %207 : vector<16x128xf32>
    %209 = math.tanh %203 : vector<16x128xf32>
    %210 = vector.extract_strided_slice %208 {offsets = [0, 32], sizes = [16, 32], strides = [1, 1]} : vector<16x128xf32> to vector<16x32xf32>
    %211 = arith.mulf %210, %175 : vector<16x32xf32>
    %212 = vector.extract_strided_slice %208 {offsets = [0, 0], sizes = [16, 32], strides = [1, 1]} : vector<16x128xf32> to vector<16x32xf32>
    %213 = vector.extract_strided_slice %209 {offsets = [0, 64], sizes = [16, 32], strides = [1, 1]} : vector<16x128xf32> to vector<16x32xf32>
    %214 = arith.mulf %212, %213 : vector<16x32xf32>
    %215 = arith.addf %211, %214 : vector<16x32xf32>
    %216 = vector.extract_strided_slice %208 {offsets = [0, 96], sizes = [16, 32], strides = [1, 1]} : vector<16x128xf32> to vector<16x32xf32>
    %217 = math.tanh %215 : vector<16x32xf32>
    %218 = arith.mulf %216, %217 : vector<16x32xf32>
    %219 = vector.extract_strided_slice %218 {offsets = [0, 0], sizes = [8, 32], strides = [1, 1]} : vector<16x32xf32> to vector<8x32xf32>
    %220 = arith.index_cast %c4_i32 : i32 to index
    %c0_70 = arith.constant 0 : index
    %c0_71 = arith.constant 0 : index
    %221 = vector.load %arg9[%220, %c0_70, %c0_71] : memref<8x8x64xf32, #tpu.memory_space<vmem>>, vector<1x8x32xf32>
    %222 = vector.shape_cast %221 : vector<1x8x32xf32> to vector<8x32xf32>
    %223 = vector.shape_cast %219 : vector<8x32xf32> to vector<1x8x32xf32>
    tpu.vector_store %arg9[%220, %c0_70, %c0_71], %223 {strides = array<i32>} : memref<8x8x64xf32, #tpu.memory_space<vmem>>, vector<1x8x32xf32>,
    %224 = vector.extract_strided_slice %218 {offsets = [8, 0], sizes = [8, 32], strides = [1, 1]} : vector<16x32xf32> to vector<8x32xf32>
    %225 = arith.index_cast %189 : i32 to index
    %c0_72 = arith.constant 0 : index
    %c32_73 = arith.constant 32 : index
    %226 = vector.load %arg9[%225, %c0_72, %c32_73] : memref<8x8x64xf32, #tpu.memory_space<vmem>>, vector<1x8x32xf32>
    %227 = vector.shape_cast %226 : vector<1x8x32xf32> to vector<8x32xf32>
    %228 = vector.shape_cast %224 : vector<8x32xf32> to vector<1x8x32xf32>
    tpu.vector_store %arg9[%225, %c0_72, %c32_73], %228 {strides = array<i32>} : memref<8x8x64xf32, #tpu.memory_space<vmem>>, vector<1x8x32xf32>,
    %c5_i32 = arith.constant 5 : i32
    %c7_i32_74 = arith.constant 7 : i32
    %229 = arith.subi %c7_i32_74, %c5_i32 : i32
    %c8_i32_75 = arith.constant 8 : i32
    %230 = arith.muli %c5_i32, %c8_i32_75 : i32
    %231 = tpu.assume_multiple %230, 8 : i32
    %c8_i32_76 = arith.constant 8 : i32
    %232 = arith.muli %229, %c8_i32_76 : i32
    %233 = tpu.assume_multiple %232, 8 : i32
    %234 = arith.index_cast %231 : i32 to index
    %c0_77 = arith.constant 0 : index
    %235 = vector.load %arg8[%234, %c0_77] : memref<64x256xf32, #tpu.memory_space<vmem>>, vector<8x128xf32>
    %236 = arith.index_cast %233 : i32 to index
    %c128_78 = arith.constant 128 : index
    %237 = vector.load %arg8[%236, %c128_78] : memref<64x256xf32, #tpu.memory_space<vmem>>, vector<8x128xf32>
    %cst_79 = arith.constant dense<0.000000e+00> : vector<16x256xf32>
    %238 = tpu.matmul %218, %27, %cst_79 {dimension_numbers = #tpu.dot_dimension_numbers<[1], [0], [0], [1], [0, 0, 1, 1], [], []>} : vector<16x32xf32>, vector<32x256xf32>, vector<16x256xf32> -> vector<16x256xf32>
    %239 = vector.extract_strided_slice %238 {offsets = [0, 0], sizes = [8, 128], strides = [1, 1]} : vector<16x256xf32> to vector<8x128xf32>
    %240 = arith.addf %235, %239 : vector<8x128xf32>
    %241 = vector.extract_strided_slice %238 {offsets = [8, 128], sizes = [8, 128], strides = [1, 1]} : vector<16x256xf32> to vector<8x128xf32>
    %242 = arith.addf %237, %241 : vector<8x128xf32>
    %243 = tpu.concatenate %240, %242 in 0 : vector<8x128xf32>, vector<8x128xf32> -> vector<16x128xf32>
    %244 = arith.negf %243 : vector<16x128xf32>
    %245 = math.exp %244 : vector<16x128xf32>
    %cst_80 = arith.constant 1.000000e+00 : f32
    %246 = vector.broadcast %cst_80 : f32 to vector<16x128xf32>
    %247 = arith.addf %246, %245 : vector<16x128xf32>
    %248 = arith.divf %246, %247 : vector<16x128xf32>
    %249 = math.tanh %243 : vector<16x128xf32>
    %250 = vector.extract_strided_slice %248 {offsets = [0, 32], sizes = [16, 32], strides = [1, 1]} : vector<16x128xf32> to vector<16x32xf32>
    %251 = arith.mulf %250, %215 : vector<16x32xf32>
    %252 = vector.extract_strided_slice %248 {offsets = [0, 0], sizes = [16, 32], strides = [1, 1]} : vector<16x128xf32> to vector<16x32xf32>
    %253 = vector.extract_strided_slice %249 {offsets = [0, 64], sizes = [16, 32], strides = [1, 1]} : vector<16x128xf32> to vector<16x32xf32>
    %254 = arith.mulf %252, %253 : vector<16x32xf32>
    %255 = arith.addf %251, %254 : vector<16x32xf32>
    %256 = vector.extract_strided_slice %248 {offsets = [0, 96], sizes = [16, 32], strides = [1, 1]} : vector<16x128xf32> to vector<16x32xf32>
    %257 = math.tanh %255 : vector<16x32xf32>
    %258 = arith.mulf %256, %257 : vector<16x32xf32>
    %259 = vector.extract_strided_slice %258 {offsets = [0, 0], sizes = [8, 32], strides = [1, 1]} : vector<16x32xf32> to vector<8x32xf32>
    %260 = arith.index_cast %c5_i32 : i32 to index
    %c0_81 = arith.constant 0 : index
    %c0_82 = arith.constant 0 : index
    %261 = vector.load %arg9[%260, %c0_81, %c0_82] : memref<8x8x64xf32, #tpu.memory_space<vmem>>, vector<1x8x32xf32>
    %262 = vector.shape_cast %261 : vector<1x8x32xf32> to vector<8x32xf32>
    %263 = vector.shape_cast %259 : vector<8x32xf32> to vector<1x8x32xf32>
    tpu.vector_store %arg9[%260, %c0_81, %c0_82], %263 {strides = array<i32>} : memref<8x8x64xf32, #tpu.memory_space<vmem>>, vector<1x8x32xf32>,
    %264 = vector.extract_strided_slice %258 {offsets = [8, 0], sizes = [8, 32], strides = [1, 1]} : vector<16x32xf32> to vector<8x32xf32>
    %265 = arith.index_cast %229 : i32 to index
    %c0_83 = arith.constant 0 : index
    %c32_84 = arith.constant 32 : index
    %266 = vector.load %arg9[%265, %c0_83, %c32_84] : memref<8x8x64xf32, #tpu.memory_space<vmem>>, vector<1x8x32xf32>
    %267 = vector.shape_cast %266 : vector<1x8x32xf32> to vector<8x32xf32>
    %268 = vector.shape_cast %264 : vector<8x32xf32> to vector<1x8x32xf32>
    tpu.vector_store %arg9[%265, %c0_83, %c32_84], %268 {strides = array<i32>} : memref<8x8x64xf32, #tpu.memory_space<vmem>>, vector<1x8x32xf32>,
    %c6_i32 = arith.constant 6 : i32
    %c7_i32_85 = arith.constant 7 : i32
    %269 = arith.subi %c7_i32_85, %c6_i32 : i32
    %c8_i32_86 = arith.constant 8 : i32
    %270 = arith.muli %c6_i32, %c8_i32_86 : i32
    %271 = tpu.assume_multiple %270, 8 : i32
    %c8_i32_87 = arith.constant 8 : i32
    %272 = arith.muli %269, %c8_i32_87 : i32
    %273 = tpu.assume_multiple %272, 8 : i32
    %274 = arith.index_cast %271 : i32 to index
    %c0_88 = arith.constant 0 : index
    %275 = vector.load %arg8[%274, %c0_88] : memref<64x256xf32, #tpu.memory_space<vmem>>, vector<8x128xf32>
    %276 = arith.index_cast %273 : i32 to index
    %c128_89 = arith.constant 128 : index
    %277 = vector.load %arg8[%276, %c128_89] : memref<64x256xf32, #tpu.memory_space<vmem>>, vector<8x128xf32>
    %cst_90 = arith.constant dense<0.000000e+00> : vector<16x256xf32>
    %278 = tpu.matmul %258, %27, %cst_90 {dimension_numbers = #tpu.dot_dimension_numbers<[1], [0], [0], [1], [0, 0, 1, 1], [], []>} : vector<16x32xf32>, vector<32x256xf32>, vector<16x256xf32> -> vector<16x256xf32>
    %279 = vector.extract_strided_slice %278 {offsets = [0, 0], sizes = [8, 128], strides = [1, 1]} : vector<16x256xf32> to vector<8x128xf32>
    %280 = arith.addf %275, %279 : vector<8x128xf32>
    %281 = vector.extract_strided_slice %278 {offsets = [8, 128], sizes = [8, 128], strides = [1, 1]} : vector<16x256xf32> to vector<8x128xf32>
    %282 = arith.addf %277, %281 : vector<8x128xf32>
    %283 = tpu.concatenate %280, %282 in 0 : vector<8x128xf32>, vector<8x128xf32> -> vector<16x128xf32>
    %284 = arith.negf %283 : vector<16x128xf32>
    %285 = math.exp %284 : vector<16x128xf32>
    %cst_91 = arith.constant 1.000000e+00 : f32
    %286 = vector.broadcast %cst_91 : f32 to vector<16x128xf32>
    %287 = arith.addf %286, %285 : vector<16x128xf32>
    %288 = arith.divf %286, %287 : vector<16x128xf32>
    %289 = math.tanh %283 : vector<16x128xf32>
    %290 = vector.extract_strided_slice %288 {offsets = [0, 32], sizes = [16, 32], strides = [1, 1]} : vector<16x128xf32> to vector<16x32xf32>
    %291 = arith.mulf %290, %255 : vector<16x32xf32>
    %292 = vector.extract_strided_slice %288 {offsets = [0, 0], sizes = [16, 32], strides = [1, 1]} : vector<16x128xf32> to vector<16x32xf32>
    %293 = vector.extract_strided_slice %289 {offsets = [0, 64], sizes = [16, 32], strides = [1, 1]} : vector<16x128xf32> to vector<16x32xf32>
    %294 = arith.mulf %292, %293 : vector<16x32xf32>
    %295 = arith.addf %291, %294 : vector<16x32xf32>
    %296 = vector.extract_strided_slice %288 {offsets = [0, 96], sizes = [16, 32], strides = [1, 1]} : vector<16x128xf32> to vector<16x32xf32>
    %297 = math.tanh %295 : vector<16x32xf32>
    %298 = arith.mulf %296, %297 : vector<16x32xf32>
    %299 = vector.extract_strided_slice %298 {offsets = [0, 0], sizes = [8, 32], strides = [1, 1]} : vector<16x32xf32> to vector<8x32xf32>
    %300 = arith.index_cast %c6_i32 : i32 to index
    %c0_92 = arith.constant 0 : index
    %c0_93 = arith.constant 0 : index
    %301 = vector.load %arg9[%300, %c0_92, %c0_93] : memref<8x8x64xf32, #tpu.memory_space<vmem>>, vector<1x8x32xf32>
    %302 = vector.shape_cast %301 : vector<1x8x32xf32> to vector<8x32xf32>
    %303 = vector.shape_cast %299 : vector<8x32xf32> to vector<1x8x32xf32>
    tpu.vector_store %arg9[%300, %c0_92, %c0_93], %303 {strides = array<i32>} : memref<8x8x64xf32, #tpu.memory_space<vmem>>, vector<1x8x32xf32>,
    %304 = vector.extract_strided_slice %298 {offsets = [8, 0], sizes = [8, 32], strides = [1, 1]} : vector<16x32xf32> to vector<8x32xf32>
    %305 = arith.index_cast %269 : i32 to index
    %c0_94 = arith.constant 0 : index
    %c32_95 = arith.constant 32 : index
    %306 = vector.load %arg9[%305, %c0_94, %c32_95] : memref<8x8x64xf32, #tpu.memory_space<vmem>>, vector<1x8x32xf32>
    %307 = vector.shape_cast %306 : vector<1x8x32xf32> to vector<8x32xf32>
    %308 = vector.shape_cast %304 : vector<8x32xf32> to vector<1x8x32xf32>
    tpu.vector_store %arg9[%305, %c0_94, %c32_95], %308 {strides = array<i32>} : memref<8x8x64xf32, #tpu.memory_space<vmem>>, vector<1x8x32xf32>,
    %c7_i32_96 = arith.constant 7 : i32
    %c7_i32_97 = arith.constant 7 : i32
    %309 = arith.subi %c7_i32_97, %c7_i32_96 : i32
    %c8_i32_98 = arith.constant 8 : i32
    %310 = arith.muli %c7_i32_96, %c8_i32_98 : i32
    %311 = tpu.assume_multiple %310, 8 : i32
    %c8_i32_99 = arith.constant 8 : i32
    %312 = arith.muli %309, %c8_i32_99 : i32
    %313 = tpu.assume_multiple %312, 8 : i32
    %314 = arith.index_cast %311 : i32 to index
    %c0_100 = arith.constant 0 : index
    %315 = vector.load %arg8[%314, %c0_100] : memref<64x256xf32, #tpu.memory_space<vmem>>, vector<8x128xf32>
    %316 = arith.index_cast %313 : i32 to index
    %c128_101 = arith.constant 128 : index
    %317 = vector.load %arg8[%316, %c128_101] : memref<64x256xf32, #tpu.memory_space<vmem>>, vector<8x128xf32>
    %cst_102 = arith.constant dense<0.000000e+00> : vector<16x256xf32>
    %318 = tpu.matmul %298, %27, %cst_102 {dimension_numbers = #tpu.dot_dimension_numbers<[1], [0], [0], [1], [0, 0, 1, 1], [], []>} : vector<16x32xf32>, vector<32x256xf32>, vector<16x256xf32> -> vector<16x256xf32>
    %319 = vector.extract_strided_slice %318 {offsets = [0, 0], sizes = [8, 128], strides = [1, 1]} : vector<16x256xf32> to vector<8x128xf32>
    %320 = arith.addf %315, %319 : vector<8x128xf32>
    %321 = vector.extract_strided_slice %318 {offsets = [8, 128], sizes = [8, 128], strides = [1, 1]} : vector<16x256xf32> to vector<8x128xf32>
    %322 = arith.addf %317, %321 : vector<8x128xf32>
    %323 = tpu.concatenate %320, %322 in 0 : vector<8x128xf32>, vector<8x128xf32> -> vector<16x128xf32>
    %324 = arith.negf %323 : vector<16x128xf32>
    %325 = math.exp %324 : vector<16x128xf32>
    %cst_103 = arith.constant 1.000000e+00 : f32
    %326 = vector.broadcast %cst_103 : f32 to vector<16x128xf32>
    %327 = arith.addf %326, %325 : vector<16x128xf32>
    %328 = arith.divf %326, %327 : vector<16x128xf32>
    %329 = math.tanh %323 : vector<16x128xf32>
    %330 = vector.extract_strided_slice %328 {offsets = [0, 32], sizes = [16, 32], strides = [1, 1]} : vector<16x128xf32> to vector<16x32xf32>
    %331 = arith.mulf %330, %295 : vector<16x32xf32>
    %332 = vector.extract_strided_slice %328 {offsets = [0, 0], sizes = [16, 32], strides = [1, 1]} : vector<16x128xf32> to vector<16x32xf32>
    %333 = vector.extract_strided_slice %329 {offsets = [0, 64], sizes = [16, 32], strides = [1, 1]} : vector<16x128xf32> to vector<16x32xf32>
    %334 = arith.mulf %332, %333 : vector<16x32xf32>
    %335 = arith.addf %331, %334 : vector<16x32xf32>
    %336 = vector.extract_strided_slice %328 {offsets = [0, 96], sizes = [16, 32], strides = [1, 1]} : vector<16x128xf32> to vector<16x32xf32>
    %337 = math.tanh %335 : vector<16x32xf32>
    %338 = arith.mulf %336, %337 : vector<16x32xf32>
    %339 = vector.extract_strided_slice %338 {offsets = [0, 0], sizes = [8, 32], strides = [1, 1]} : vector<16x32xf32> to vector<8x32xf32>
    %340 = arith.index_cast %c7_i32_96 : i32 to index
    %c0_104 = arith.constant 0 : index
    %c0_105 = arith.constant 0 : index
    %341 = vector.load %arg9[%340, %c0_104, %c0_105] : memref<8x8x64xf32, #tpu.memory_space<vmem>>, vector<1x8x32xf32>
    %342 = vector.shape_cast %341 : vector<1x8x32xf32> to vector<8x32xf32>
    %343 = vector.shape_cast %339 : vector<8x32xf32> to vector<1x8x32xf32>
    tpu.vector_store %arg9[%340, %c0_104, %c0_105], %343 {strides = array<i32>} : memref<8x8x64xf32, #tpu.memory_space<vmem>>, vector<1x8x32xf32>,
    %344 = vector.extract_strided_slice %338 {offsets = [8, 0], sizes = [8, 32], strides = [1, 1]} : vector<16x32xf32> to vector<8x32xf32>
    %345 = arith.index_cast %309 : i32 to index
    %c0_106 = arith.constant 0 : index
    %c32_107 = arith.constant 32 : index
    %346 = vector.load %arg9[%345, %c0_106, %c32_107] : memref<8x8x64xf32, #tpu.memory_space<vmem>>, vector<1x8x32xf32>
    %347 = vector.shape_cast %346 : vector<1x8x32xf32> to vector<8x32xf32>
    %348 = vector.shape_cast %344 : vector<8x32xf32> to vector<1x8x32xf32>
    tpu.vector_store %arg9[%345, %c0_106, %c32_107], %348 {strides = array<i32>} : memref<8x8x64xf32, #tpu.memory_space<vmem>>, vector<1x8x32xf32>,
    %c8_i32_108 = arith.constant 8 : i32
    %c0_109 = arith.constant 0 : index
    %c0_110 = arith.constant 0 : index
    %c0_111 = arith.constant 0 : index
    %349 = vector.load %arg9[%c0_109, %c0_110, %c0_111] : memref<8x8x64xf32, #tpu.memory_space<vmem>>, vector<8x8x64xf32>
    %350 = vector.shape_cast %4 : vector<1x64xf32> to vector<1x1x64xf32>
    %351 = vector.broadcast %350 : vector<1x1x64xf32> to vector<8x8x64xf32>
    %352 = arith.mulf %349, %351 : vector<8x8x64xf32>
    %cst_112 = arith.constant dense<0.000000e+00> : vector<8x8xf32>
    %353 = vector.multi_reduction <add>, %352, %cst_112 [2] : vector<8x8x64xf32> to vector<8x8xf32>
    %354 = vector.shape_cast %353 : vector<8x8xf32> to vector<8x8x1xf32>
    %355 = vector.broadcast %6 : f32 to vector<8x8x1xf32>
    %356 = arith.addf %354, %355 : vector<8x8x1xf32>
    %cst_113 = arith.constant dense<0xFF800000> : vector<8x1xf32>
    %357 = vector.multi_reduction <maximumf>, %356, %cst_113 [0] : vector<8x8x1xf32> to vector<8x1xf32>
    %358 = vector.shape_cast %357 : vector<8x1xf32> to vector<1x8x1xf32>
    %359 = vector.broadcast %358 : vector<1x8x1xf32> to vector<8x8x1xf32>
    %360 = arith.subf %356, %359 : vector<8x8x1xf32>
    %361 = math.exp %360 : vector<8x8x1xf32>
    %cst_114 = arith.constant dense<0.000000e+00> : vector<8x1xf32>
    %362 = vector.multi_reduction <add>, %361, %cst_114 [0] : vector<8x8x1xf32> to vector<8x1xf32>
    %363 = vector.shape_cast %362 : vector<8x1xf32> to vector<1x8x1xf32>
    %364 = tpu.reciprocal %363 {approx = true} : vector<1x8x1xf32> -> vector<1x8x1xf32>
    %365 = vector.broadcast %364 : vector<1x8x1xf32> to vector<8x8x1xf32>
    %366 = arith.mulf %361, %365 : vector<8x8x1xf32>
    %367 = vector.broadcast %366 : vector<8x8x1xf32> to vector<8x8x64xf32>
    %368 = arith.mulf %349, %367 : vector<8x8x64xf32>
    %cst_115 = arith.constant dense<0.000000e+00> : vector<8x64xf32>
    %369 = vector.multi_reduction <add>, %368, %cst_115 [0] : vector<8x8x64xf32> to vector<8x64xf32>
    %370 = vector.broadcast %7 : vector<1x64xf32> to vector<8x64xf32>
    %371 = arith.mulf %369, %370 : vector<8x64xf32>
    %372 = vector.broadcast %8 : vector<1x64xf32> to vector<8x64xf32>
    %373 = arith.addf %371, %372 : vector<8x64xf32>
    %c0_116 = arith.constant 0 : index
    %c0_117 = arith.constant 0 : index
    %374 = vector.load %arg5[%c0_116, %c0_117] : memref<64x2xf32, #tpu.memory_space<vmem>>, vector<64x2xf32>
    %cst_118 = arith.constant dense<0.000000e+00> : vector<8x2xf32>
    %375 = tpu.matmul %373, %374, %cst_118 {dimension_numbers = #tpu.dot_dimension_numbers<[1], [0], [0], [1], [0, 0, 1, 1], [], []>} : vector<8x64xf32>, vector<64x2xf32>, vector<8x2xf32> -> vector<8x2xf32>
    %376 = vector.broadcast %9 : vector<1x2xf32> to vector<8x2xf32>
    %377 = arith.addf %375, %376 : vector<8x2xf32>
    %c0_119 = arith.constant 0 : index
    %c0_120 = arith.constant 0 : index
    %378 = vector.load %arg7[%c0_119, %c0_120] : memref<8x2xf32, #tpu.memory_space<vmem>>, vector<8x2xf32>
    tpu.vector_store %arg7[%c0_119, %c0_120], %377 {strides = array<i32>} : memref<8x2xf32, #tpu.memory_space<vmem>>, vector<8x2xf32>,
    return
  }
  func.func @transform_0(%arg0: i32) -> (i32, i32, i32) {
    %c0_i32 = arith.constant 0 : i32
    %c0_i32_0 = arith.constant 0 : i32
    %c0_i32_1 = arith.constant 0 : i32
    return %arg0, %c0_i32, %c0_i32_0 : i32, i32, i32
  }
  func.func @transform_1(%arg0: i32) -> (i32, i32) {
    %c0_i32 = arith.constant 0 : i32
    %c0_i32_0 = arith.constant 0 : i32
    %c0_i32_1 = arith.constant 0 : i32
    return %c0_i32, %c0_i32_0 : i32, i32
  }
  func.func @transform_2(%arg0: i32) -> (i32, i32) {
    %c0_i32 = arith.constant 0 : i32
    %c0_i32_0 = arith.constant 0 : i32
    %c0_i32_1 = arith.constant 0 : i32
    return %c0_i32, %c0_i32_0 : i32, i32
  }
  func.func @transform_3(%arg0: i32) -> (i32, i32) {
    %c0_i32 = arith.constant 0 : i32
    %c0_i32_0 = arith.constant 0 : i32
    %c0_i32_1 = arith.constant 0 : i32
    return %c0_i32, %c0_i32_0 : i32, i32
  }
  func.func @transform_4(%arg0: i32) -> (i32, i32) {
    %c0_i32 = arith.constant 0 : i32
    %c0_i32_0 = arith.constant 0 : i32
    %c0_i32_1 = arith.constant 0 : i32
    return %c0_i32, %c0_i32_0 : i32, i32
  }
  func.func @transform_5(%arg0: i32) -> (i32, i32) {
    %c0_i32 = arith.constant 0 : i32
    %c0_i32_0 = arith.constant 0 : i32
    %c0_i32_1 = arith.constant 0 : i32
    return %c0_i32, %c0_i32_0 : i32, i32
  }
  func.func @transform_6(%arg0: i32) -> (i32, i32) {
    %c0_i32 = arith.constant 0 : i32
    %c0_i32_0 = arith.constant 0 : i32
    return %arg0, %c0_i32 : i32, i32
  }
}

</mosaic_0001>

<llo_original>
// kernel: tpu_custom_call.1
$region0: #{tpu_custom_call.1}
  #allocation0 [shape = 'u32[]', space=smem, size = 0x4, offset = 0x4, fixed_abs, tag = 'smem constant byte address 0x4 - core index']
  #allocation1 [shape = 'u32[144,128]{1,0:T(1,128)}', space=vmem, size = 0x12000, scoped, tag = 'internal scratch']
  #allocation2 [shape = 'f32[64,256]{1,0:T(8,128)}', space=vmem, size = 0x10000, scoped, tag = 'scratch operand']
  #allocation3 [shape = 'f32[8,8,64]{2,1,0:T(8,128)}', space=vmem, size = 0x8000, scoped, tag = 'scratch operand']
  %s0 = inlined_call_operand.vmem [shape: f32[1,64,128], index: 0, kind: input, shape index: {}]
  %s1 = inlined_call_operand.vmem [shape: f32[128,64], index: 1, kind: input, shape index: {}]
  %s2 = inlined_call_operand.vmem [shape: f32[64,256], index: 2, kind: input, shape index: {}]
  %s3 = inlined_call_operand.vmem [shape: f32[32,256], index: 3, kind: input, shape index: {}]
  %s4 = inlined_call_operand.vmem [shape: f32[64,2], index: 4, kind: input, shape index: {}]
  %s5 = inlined_call_operand.hbm [shape: f32[9,256], index: 5, kind: input, shape index: {}]
  %s6 = inlined_call_operand.vmem [shape: f32[8,2], index: 6, kind: output, shape index: {}]
  %s7 = sld [smem:[#allocation0]]
  $region38: #{tpu_custom_call.1} parent=0
    _
  %s9 = ssub.s32 1, %s7
  %s10 = scalar_select 0, %s9, %s7
  $region1: #{tpu_custom_call.1} parent=0
    #allocation4 [shape = 'u8[16384]{0}', space=vmem, size = 0x4000, scoped, tag = 'input window, operand 5, single buffered']
    #allocation5 [shape = 's32[1]{0}', space=sflag, size = 0x4, scoped, tag = 'scoped memory for tpu_custom_call.1']
    %11 = vsyncpa [#allocation5], 0
    // Predicated region
    $region2: #{tpu_custom_call.1} parent=1 // pred_check
      _
    $region3: #{tpu_custom_call.1} parent=1 // pred_check_branch
      %13 = sbr.rel (0) target = $region5
    $region4: #{tpu_custom_call.1} parent=1 // pred_region
      _
    $region5: #{tpu_custom_call.1} parent=1 // pred_fallthru
      _
    // Predicated region
    $region6: #{tpu_custom_call.1} parent=1 // pred_check
      _
    $region7: #{tpu_custom_call.1} parent=1 // pred_check_branch
      %15 = sbr.rel (0) target = $region9
    $region8: #{tpu_custom_call.1} parent=1 // pred_region
      _
    $region9: #{tpu_custom_call.1} parent=1 // pred_fallthru
      _
    // Predicated region
    $region10: #{tpu_custom_call.1} parent=1 // pred_check
      _
    $region11: #{tpu_custom_call.1} parent=1 // pred_check_branch
      %17 = sbr.rel (0) target = $region13
    $region12: #{tpu_custom_call.1} parent=1 // pred_region
      _
    $region13: #{tpu_custom_call.1} parent=1 // pred_fallthru
      _
    // Predicated region
    $region14: #{tpu_custom_call.1} parent=1 // pred_check
      _
    $region15: #{tpu_custom_call.1} parent=1 // pred_check_branch
      %19 = sbr.rel (0) target = $region17
    $region16: #{tpu_custom_call.1} parent=1 // pred_region
      _
    $region17: #{tpu_custom_call.1} parent=1 // pred_fallthru
      _
    // Predicated region
    $region18: #{tpu_custom_call.1} parent=1 // pred_check
      _
    $region19: #{tpu_custom_call.1} parent=1 // pred_check_branch
      %21 = sbr.rel (0) target = $region21
    $region20: #{tpu_custom_call.1} parent=1 // pred_region
      _
    $region21: #{tpu_custom_call.1} parent=1 // pred_fallthru
      _
    // Predicated region
    $region22: #{tpu_custom_call.1} parent=1 // pred_check
      _
    $region23: #{tpu_custom_call.1} parent=1 // pred_check_branch
      %23 = sbr.rel (0) target = $region25
    $region24: #{tpu_custom_call.1} parent=1 // pred_region
      %s25 = ssub.s32 512, 512
      %26 = vsyncadd [#allocation5], %s25
      %s27 = sshll.u32 [#allocation4], 4
      %s28 = int_to_ptr.vmem [resolvable:$true] %s27
      %33 = dma.hbm_to_vmem [thread:$0]  %s5, 512, %s28, [#allocation5], 256, 256, 16
    $region25: #{tpu_custom_call.1} parent=1 // pred_fallthru
      _
    // Predicated region
    $region26: #{tpu_custom_call.1} parent=1 // pred_check
      _
    $region27: #{tpu_custom_call.1} parent=1 // pred_check_branch
      %35 = sbr.rel (0) target = $region29
    $region28: #{tpu_custom_call.1} parent=1 // pred_region
      %36 = dma.done [#allocation5], 512
    $region29: #{tpu_custom_call.1} parent=1 // pred_fallthru
      _
    %v37 = vld [vmem:[#allocation4] ss:$0 sm:$0xff]
    %v38 = vld [vmem:[#allocation4 + $0x1] ss:$0 sm:$0xff]
    %v39 = vld [vmem:[#allocation4 + $0x2] ss:$0 sm:$0xff]
    %s40 = scalar_lea.vmem [#allocation4], 3
    %v41 = vld [vmem:[%s40] ss:$8 sm:$0x3]
    %v42 = vld [vmem:[#allocation4 + $0x4] ss:$0 sm:$0xff]
    %v43 = vld [vmem:[#allocation4 + $0x5] ss:$0 sm:$0xff]
    %s44 = vtos %v43
    %v45 = vld [vmem:[#allocation4 + $0x6] ss:$0 sm:$0xff]
    %v46 = vld [vmem:[#allocation4 + $0x7] ss:$0 sm:$0xff]
    %v47 = vld [vmem:[#allocation4 + $0x10] ss:$0 sm:$0xff]
    %v48 = vld [vmem:[%s0] sm:$0xff]
    %v49 = vld [vmem:[%s0 + $0x8] sm:$0xff]
    %v50 = vld [vmem:[%s0 + $0x10] sm:$0xff]
    %v51 = vld [vmem:[%s0 + $0x18] sm:$0xff]
    %v52 = vld [vmem:[%s0 + $0x20] sm:$0xff]
    %v53 = vld [vmem:[%s0 + $0x28] sm:$0xff]
    %v54 = vld [vmem:[%s0 + $0x30] sm:$0xff]
    %v55 = vld [vmem:[%s0 + $0x38] sm:$0xff]
    %v56 = vld [vmem:[%s1] sm:$0xff]
    %v57 = vld [vmem:[%s1 + $0x8] sm:$0xff]
    %v58 = vld [vmem:[%s1 + $0x10] sm:$0xff]
    %v59 = vld [vmem:[%s1 + $0x18] sm:$0xff]
    %v60 = vld [vmem:[%s1 + $0x20] sm:$0xff]
    %v61 = vld [vmem:[%s1 + $0x28] sm:$0xff]
    %v62 = vld [vmem:[%s1 + $0x30] sm:$0xff]
    %v63 = vld [vmem:[%s1 + $0x38] sm:$0xff]
    %v64 = vld [vmem:[%s1 + $0x40] sm:$0xff]
    %v65 = vld [vmem:[%s1 + $0x48] sm:$0xff]
    %v66 = vld [vmem:[%s1 + $0x50] sm:$0xff]
    %v67 = vld [vmem:[%s1 + $0x58] sm:$0xff]
    %v68 = vld [vmem:[%s1 + $0x60] sm:$0xff]
    %v69 = vld [vmem:[%s1 + $0x68] sm:$0xff]
    %v70 = vld [vmem:[%s1 + $0x70] sm:$0xff]
    %v71 = vld [vmem:[%s1 + $0x78] sm:$0xff]
    %72 = vmatprep.subr.mxu0 0.0
    %73 = vmatpush1.msra.mxu0 %v71
    %74 = vmatprep.subr.mxu0 0.0
    %75 = vmatpush1.msra.mxu0 %v70
    %76 = vmatprep.subr.mxu0 0.0
    %77 = vmatpush1.msra.mxu0 %v69
    %78 = vmatprep.subr.mxu0 0.0
    %79 = vmatpush1.msra.mxu0 %v68
    %80 = vmatprep.subr.mxu0 0.0
    %81 = vmatpush1.msra.mxu0 %v67
    %82 = vmatprep.subr.mxu0 0.0
    %83 = vmatpush1.msra.mxu0 %v66
    %84 = vmatprep.subr.mxu0 0.0
    %85 = vmatpush1.msra.mxu0 %v65
    %86 = vmatprep.subr.mxu0 0.0
    %87 = vmatpush1.msra.mxu0 %v64
    %88 = vmatprep.subr.mxu0 0.0
    %89 = vmatpush1.msra.mxu0 %v63
    %90 = vmatprep.subr.mxu0 0.0
    %91 = vmatpush1.msra.mxu0 %v62
    %92 = vmatprep.subr.mxu0 0.0
    %93 = vmatpush1.msra.mxu0 %v61
    %94 = vmatprep.subr.mxu0 0.0
    %95 = vmatpush1.msra.mxu0 %v60
    %96 = vmatprep.subr.mxu0 0.0
    %97 = vmatpush1.msra.mxu0 %v59
    %98 = vmatprep.subr.mxu0 0.0
    %99 = vmatpush1.msra.mxu0 %v58
    %100 = vmatprep.subr.mxu0 0.0
    %101 = vmatpush1.msra.mxu0 %v57
    %102 = vmatprep.subr.mxu0 0.0
    %103 = vmatpush1.msra.mxu0 %v56
    %104 = vmatprep.subr.mxu0 0.0
    %105 = vmatpush2.msra.mxu0 0.0
    %106 = vmatprep.subr.mxu0 0.0
    %107 = vmatpush2.msra.mxu0 0.0
    %108 = vmatprep.subr.mxu0 0.0
    %109 = vmatpush2.msra.mxu0 0.0
    %110 = vmatprep.subr.mxu0 0.0
    %111 = vmatpush2.msra.mxu0 0.0
    %112 = vmatprep.subr.mxu0 0.0
    %113 = vmatpush2.msra.mxu0 0.0
    %114 = vmatprep.subr.mxu0 0.0
    %115 = vmatpush2.msra.mxu0 0.0
    %116 = vmatprep.subr.mxu0 0.0
    %117 = vmatpush2.msra.mxu0 0.0
    %118 = vmatprep.subr.mxu0 0.0
    %119 = vmatpush2.msra.mxu0 0.0
    %120 = vmatprep.subr.mxu0 0.0
    %121 = vmatpush2.msra.mxu0 0.0
    %122 = vmatprep.subr.mxu0 0.0
    %123 = vmatpush2.msra.mxu0 0.0
    %124 = vmatprep.subr.mxu0 0.0
    %125 = vmatpush2.msra.mxu0 0.0
    %126 = vmatprep.subr.mxu0 0.0
    %127 = vmatpush2.msra.mxu0 0.0
    %128 = vmatprep.subr.mxu0 0.0
    %129 = vmatpush2.msra.mxu0 0.0
    %130 = vmatprep.subr.mxu0 0.0
    %131 = vmatpush2.msra.mxu0 0.0
    %132 = vmatprep.subr.mxu0 0.0
    %133 = vmatpush2.msra.mxu0 0.0
    %134 = vmatprep.subr.mxu0 0.0
    %135 = vmatpush2.msra.mxu0 0.0
    %136 = vmatprep.mubr.f32.mxu0 0.0
    %137 = vmatmul.mubr.f32.gmra.mxu0 %v48
    %v138 = vpop.f32.mrf.mxu0
    %v139 = vadd.f32 %v37, %v138
    %v140 = vpop.f32.mrf.mxu0
    %141 = vmatprep.mubr.f32.mxu0 0.0
    %142 = vmatmul.mubr.f32.gmra.mxu0 %v49
    %v143 = vpop.f32.mrf.mxu0
    %v144 = vadd.f32 %v37, %v143
    %v145 = vpop.f32.mrf.mxu0
    %146 = vmatprep.mubr.f32.mxu0 0.0
    %147 = vmatmul.mubr.f32.gmra.mxu0 %v50
    %v148 = vpop.f32.mrf.mxu0
    %v149 = vadd.f32 %v37, %v148
    %v150 = vpop.f32.mrf.mxu0
    %151 = vmatprep.mubr.f32.mxu0 0.0
    %152 = vmatmul.mubr.f32.gmra.mxu0 %v51
    %v153 = vpop.f32.mrf.mxu0
    %v154 = vadd.f32 %v37, %v153
    %v155 = vpop.f32.mrf.mxu0
    %156 = vmatprep.mubr.f32.mxu0 0.0
    %157 = vmatmul.mubr.f32.gmra.mxu0 %v52
    %v158 = vpop.f32.mrf.mxu0
    %v159 = vadd.f32 %v37, %v158
    %v160 = vpop.f32.mrf.mxu0
    %161 = vmatprep.mubr.f32.mxu0 0.0
    %162 = vmatmul.mubr.f32.gmra.mxu0 %v53
    %v163 = vpop.f32.mrf.mxu0
    %v164 = vadd.f32 %v37, %v163
    %v165 = vpop.f32.mrf.mxu0
    %166 = vmatprep.mubr.f32.mxu0 0.0
    %167 = vmatmul.mubr.f32.gmra.mxu0 %v54
    %v168 = vpop.f32.mrf.mxu0
    %v169 = vadd.f32 %v37, %v168
    %v170 = vpop.f32.mrf.mxu0
    %171 = vmatprep.mubr.f32.mxu0 0.0
    %172 = vmatmul.mubr.f32.gmra.mxu0 %v55
    %v173 = vpop.f32.mrf.mxu0
    %v174 = vadd.f32 %v37, %v173
    %v175 = vpop.f32.mrf.mxu0
    %176 = vdwg.mxu0
    %v177 = vmul.f32 %v139, %v38
    %v178 = vmul.f32 %v144, %v38
    %v179 = vmul.f32 %v149, %v38
    %v180 = vmul.f32 %v154, %v38
    %v181 = vmul.f32 %v159, %v38
    %v182 = vmul.f32 %v164, %v38
    %v183 = vmul.f32 %v169, %v38
    %v184 = vmul.f32 %v174, %v38
    %v185 = vadd.f32 %v177, %v39
    %v186 = vadd.f32 %v178, %v39
    %v187 = vadd.f32 %v179, %v39
    %v188 = vadd.f32 %v180, %v39
    %v189 = vadd.f32 %v181, %v39
    %v190 = vadd.f32 %v182, %v39
    %v191 = vadd.f32 %v183, %v39
    %v192 = vadd.f32 %v184, %v39
    %v193 = vmax.f32 %v185, 0.0
    %v194 = vmax.f32 %v186, 0.0
    %v195 = vmax.f32 %v187, 0.0
    %v196 = vmax.f32 %v188, 0.0
    %v197 = vmax.f32 %v189, 0.0
    %v198 = vmax.f32 %v190, 0.0
    %v199 = vmax.f32 %v191, 0.0
    %v200 = vmax.f32 %v192, 0.0
    %v201 = vld [vmem:[%s2] sm:$0xff]
    %v202 = vld [vmem:[%s2 + $0x8] sm:$0xff]
    %v203 = vld [vmem:[%s2 + $0x10] sm:$0xff]
    %v204 = vld [vmem:[%s2 + $0x18] sm:$0xff]
    %v205 = vld [vmem:[%s2 + $0x20] sm:$0xff]
    %v206 = vld [vmem:[%s2 + $0x28] sm:$0xff]
    %v207 = vld [vmem:[%s2 + $0x30] sm:$0xff]
    %v208 = vld [vmem:[%s2 + $0x38] sm:$0xff]
    %v209 = vld [vmem:[%s2 + $0x40] sm:$0xff]
    %v210 = vld [vmem:[%s2 + $0x48] sm:$0xff]
    %v211 = vld [vmem:[%s2 + $0x50] sm:$0xff]
    %v212 = vld [vmem:[%s2 + $0x58] sm:$0xff]
    %v213 = vld [vmem:[%s2 + $0x60] sm:$0xff]
    %v214 = vld [vmem:[%s2 + $0x68] sm:$0xff]
    %v215 = vld [vmem:[%s2 + $0x70] sm:$0xff]
    %v216 = vld [vmem:[%s2 + $0x78] sm:$0xff]
    %v218 = vlaneseq
    %v219 = vshrl.u32 %v218, 7
    %v220 = vsub.s32 0, %v219
    %v221 = vrot.slane %v41, %v220
    %v222 = vlaneseq
    %v223 = vshrl.u32 %v222, 7
    %v224 = vsub.s32 1, %v223
    %v225 = vrot.slane %v41, %v224
    %vm228 = vcmask 523264
    %v230 = vsel %vm228, %v193, 0
    %v233 = vsel %vm228, %v194, 0
    %v236 = vsel %vm228, %v195, 0
    %v239 = vsel %vm228, %v196, 0
    %v242 = vsel %vm228, %v197, 0
    %v245 = vsel %vm228, %v198, 0
    %v248 = vsel %vm228, %v199, 0
    %v251 = vsel %vm228, %v200, 0
    %253 = vmatprep.subr.mxu0 0.0
    %254 = vmatpush1.msra.mxu0 0.0
    %255 = vmatprep.subr.mxu0 0.0
    %256 = vmatpush1.msra.mxu0 0.0
    %257 = vmatprep.subr.mxu0 0.0
    %258 = vmatpush1.msra.mxu0 0.0
    %259 = vmatprep.subr.mxu0 0.0
    %260 = vmatpush1.msra.mxu0 0.0
    %261 = vmatprep.subr.mxu0 0.0
    %262 = vmatpush1.msra.mxu0 0.0
    %263 = vmatprep.subr.mxu0 0.0
    %264 = vmatpush1.msra.mxu0 0.0
    %265 = vmatprep.subr.mxu0 0.0
    %266 = vmatpush1.msra.mxu0 0.0
    %267 = vmatprep.subr.mxu0 0.0
    %268 = vmatpush1.msra.mxu0 0.0
    %269 = vmatprep.subr.mxu0 %v216
    %270 = vmatpush1.msra.mxu0 %v215
    %271 = vmatprep.subr.mxu0 %v214
    %272 = vmatpush1.msra.mxu0 %v213
    %273 = vmatprep.subr.mxu0 %v212
    %274 = vmatpush1.msra.mxu0 %v211
    %275 = vmatprep.subr.mxu0 %v210
    %276 = vmatpush1.msra.mxu0 %v209
    %277 = vmatprep.subr.mxu0 %v208
    %278 = vmatpush1.msra.mxu0 %v207
    %279 = vmatprep.subr.mxu0 %v206
    %280 = vmatpush1.msra.mxu0 %v205
    %281 = vmatprep.subr.mxu0 %v204
    %282 = vmatpush1.msra.mxu0 %v203
    %283 = vmatprep.subr.mxu0 %v202
    %284 = vmatpush1.msra.mxu0 %v201
    %285 = vmatprep.subr.mxu0 0.0
    %286 = vmatpush2.msra.mxu0 0.0
    %287 = vmatprep.subr.mxu0 0.0
    %288 = vmatpush2.msra.mxu0 0.0
    %289 = vmatprep.subr.mxu0 0.0
    %290 = vmatpush2.msra.mxu0 0.0
    %291 = vmatprep.subr.mxu0 0.0
    %292 = vmatpush2.msra.mxu0 0.0
    %293 = vmatprep.subr.mxu0 0.0
    %294 = vmatpush2.msra.mxu0 0.0
    %295 = vmatprep.subr.mxu0 0.0
    %296 = vmatpush2.msra.mxu0 0.0
    %297 = vmatprep.subr.mxu0 0.0
    %298 = vmatpush2.msra.mxu0 0.0
    %299 = vmatprep.subr.mxu0 0.0
    %300 = vmatpush2.msra.mxu0 0.0
    %301 = vmatprep.subr.mxu0 0.0
    %302 = vmatpush2.msra.mxu0 0.0
    %303 = vmatprep.subr.mxu0 0.0
    %304 = vmatpush2.msra.mxu0 0.0
    %305 = vmatprep.subr.mxu0 0.0
    %306 = vmatpush2.msra.mxu0 0.0
    %307 = vmatprep.subr.mxu0 0.0
    %308 = vmatpush2.msra.mxu0 0.0
    %309 = vmatprep.subr.mxu0 0.0
    %310 = vmatpush2.msra.mxu0 0.0
    %311 = vmatprep.subr.mxu0 0.0
    %312 = vmatpush2.msra.mxu0 0.0
    %313 = vmatprep.subr.mxu0 0.0
    %314 = vmatpush2.msra.mxu0 0.0
    %315 = vmatprep.subr.mxu0 0.0
    %316 = vmatpush2.msra.mxu0 0.0
    %317 = vmatprep.mubr.f32.mxu0 0.0
    %318 = vmatmul.mubr.f32.gmra.mxu0 %v230
    %v319 = vpop.f32.mrf.mxu0
    %v320 = vadd.f32 %v221, %v319
    %v321 = vpop.f32.mrf.mxu0
    %v322 = vadd.f32 %v225, %v321
    %323 = vmatprep.mubr.f32.mxu0 0.0
    %324 = vmatmul.mubr.f32.gmra.mxu0 %v233
    %v325 = vpop.f32.mrf.mxu0
    %v326 = vadd.f32 %v221, %v325
    %v327 = vpop.f32.mrf.mxu0
    %v328 = vadd.f32 %v225, %v327
    %329 = vmatprep.mubr.f32.mxu0 0.0
    %330 = vmatmul.mubr.f32.gmra.mxu0 %v236
    %v331 = vpop.f32.mrf.mxu0
    %v332 = vadd.f32 %v221, %v331
    %v333 = vpop.f32.mrf.mxu0
    %v334 = vadd.f32 %v225, %v333
    %335 = vmatprep.mubr.f32.mxu0 0.0
    %336 = vmatmul.mubr.f32.gmra.mxu0 %v239
    %v337 = vpop.f32.mrf.mxu0
    %v338 = vadd.f32 %v221, %v337
    %v339 = vpop.f32.mrf.mxu0
    %v340 = vadd.f32 %v225, %v339
    %341 = vmatprep.mubr.f32.mxu0 0.0
    %342 = vmatmul.mubr.f32.gmra.mxu0 %v242
    %v343 = vpop.f32.mrf.mxu0
    %v344 = vadd.f32 %v221, %v343
    %v345 = vpop.f32.mrf.mxu0
    %v346 = vadd.f32 %v225, %v345
    %347 = vmatprep.mubr.f32.mxu0 0.0
    %348 = vmatmul.mubr.f32.gmra.mxu0 %v245
    %v349 = vpop.f32.mrf.mxu0
    %v350 = vadd.f32 %v221, %v349
    %v351 = vpop.f32.mrf.mxu0
    %v352 = vadd.f32 %v225, %v351
    %353 = vmatprep.mubr.f32.mxu0 0.0
    %354 = vmatmul.mubr.f32.gmra.mxu0 %v248
    %v355 = vpop.f32.mrf.mxu0
    %v356 = vadd.f32 %v221, %v355
    %v357 = vpop.f32.mrf.mxu0
    %v358 = vadd.f32 %v225, %v357
    %359 = vmatprep.mubr.f32.mxu0 0.0
    %360 = vmatmul.mubr.f32.gmra.mxu0 %v251
    %v361 = vpop.f32.mrf.mxu0
    %v362 = vadd.f32 %v221, %v361
    %v363 = vpop.f32.mrf.mxu0
    %v364 = vadd.f32 %v225, %v363
    %365 = vdwg.mxu0
    %366 = vst [vmem:[#allocation2] sm:$0xff] %v320
    %367 = vst [vmem:[#allocation2 + $0x8] sm:$0xff] %v322
    %368 = vst [vmem:[#allocation2 + $0x10] sm:$0xff] %v326
    %369 = vst [vmem:[#allocation2 + $0x18] sm:$0xff] %v328
    %370 = vst [vmem:[#allocation2 + $0x20] sm:$0xff] %v332
    %371 = vst [vmem:[#allocation2 + $0x28] sm:$0xff] %v334
    %372 = vst [vmem:[#allocation2 + $0x30] sm:$0xff] %v338
    %373 = vst [vmem:[#allocation2 + $0x38] sm:$0xff] %v340
    %374 = vst [vmem:[#allocation2 + $0x40] sm:$0xff] %v344
    %375 = vst [vmem:[#allocation2 + $0x48] sm:$0xff] %v346
    %376 = vst [vmem:[#allocation2 + $0x50] sm:$0xff] %v350
    %377 = vst [vmem:[#allocation2 + $0x58] sm:$0xff] %v352
    %378 = vst [vmem:[#allocation2 + $0x60] sm:$0xff] %v356
    %379 = vst [vmem:[#allocation2 + $0x68] sm:$0xff] %v358
    %380 = vst [vmem:[#allocation2 + $0x70] sm:$0xff] %v362
    %381 = vst [vmem:[#allocation2 + $0x78] sm:$0xff] %v364
    %v382 = vld [vmem:[%s3] sm:$0xff]
    %v383 = vld [vmem:[%s3 + $0x8] sm:$0xff]
    %v384 = vld [vmem:[%s3 + $0x10] sm:$0xff]
    %v385 = vld [vmem:[%s3 + $0x18] sm:$0xff]
    %v386 = vld [vmem:[%s3 + $0x20] sm:$0xff]
    %v387 = vld [vmem:[%s3 + $0x28] sm:$0xff]
    %v388 = vld [vmem:[%s3 + $0x30] sm:$0xff]
    %v389 = vld [vmem:[%s3 + $0x38] sm:$0xff]
    %s390 = smul.u32 0, 2
    %s391 = smul.addr %s390, 8
    %s392 = scalar_lea.vmem [#allocation2], %s391
    %v393 = vld [vmem:[%s392] sm:$0xff]
    %s394 = smul.u32 7, 2
    %s395 = smul.addr %s394, 8
    %s396 = scalar_lea.vmem [#allocation2], %s395
    %v397 = vld [vmem:[%s396 + $0x8] sm:$0xff]
    %vm398 = vcmask 261120
    %v400 = vsel %vm398, 0.0, 0
    %402 = vmatprep.subr.mxu0 0.0
    %403 = vmatpush1.msra.mxu0 0.0
    %404 = vmatprep.subr.mxu0 0.0
    %405 = vmatpush1.msra.mxu0 0.0
    %406 = vmatprep.subr.mxu0 0.0
    %407 = vmatpush1.msra.mxu0 0.0
    %408 = vmatprep.subr.mxu0 0.0
    %409 = vmatpush1.msra.mxu0 0.0
    %410 = vmatprep.subr.mxu0 0.0
    %411 = vmatpush1.msra.mxu0 0.0
    %412 = vmatprep.subr.mxu0 0.0
    %413 = vmatpush1.msra.mxu0 0.0
    %414 = vmatprep.subr.mxu0 0.0
    %415 = vmatpush1.msra.mxu0 0.0
    %416 = vmatprep.subr.mxu0 0.0
    %417 = vmatpush1.msra.mxu0 0.0
    %418 = vmatprep.subr.mxu0 0.0
    %419 = vmatpush1.msra.mxu0 0.0
    %420 = vmatprep.subr.mxu0 0.0
    %421 = vmatpush1.msra.mxu0 0.0
    %422 = vmatprep.subr.mxu0 0.0
    %423 = vmatpush1.msra.mxu0 0.0
    %424 = vmatprep.subr.mxu0 0.0
    %425 = vmatpush1.msra.mxu0 0.0
    %426 = vmatprep.subr.mxu0 %v389
    %427 = vmatpush1.msra.mxu0 %v388
    %428 = vmatprep.subr.mxu0 %v387
    %429 = vmatpush1.msra.mxu0 %v386
    %430 = vmatprep.subr.mxu0 %v385
    %431 = vmatpush1.msra.mxu0 %v384
    %432 = vmatprep.subr.mxu0 %v383
    %433 = vmatpush1.msra.mxu0 %v382
    %434 = vmatprep.subr.mxu0 0.0
    %435 = vmatpush2.msra.mxu0 0.0
    %436 = vmatprep.subr.mxu0 0.0
    %437 = vmatpush2.msra.mxu0 0.0
    %438 = vmatprep.subr.mxu0 0.0
    %439 = vmatpush2.msra.mxu0 0.0
    %440 = vmatprep.subr.mxu0 0.0
    %441 = vmatpush2.msra.mxu0 0.0
    %442 = vmatprep.subr.mxu0 0.0
    %443 = vmatpush2.msra.mxu0 0.0
    %444 = vmatprep.subr.mxu0 0.0
    %445 = vmatpush2.msra.mxu0 0.0
    %446 = vmatprep.subr.mxu0 0.0
    %447 = vmatpush2.msra.mxu0 0.0
    %448 = vmatprep.subr.mxu0 0.0
    %449 = vmatpush2.msra.mxu0 0.0
    %450 = vmatprep.subr.mxu0 0.0
    %451 = vmatpush2.msra.mxu0 0.0
    %452 = vmatprep.subr.mxu0 0.0
    %453 = vmatpush2.msra.mxu0 0.0
    %454 = vmatprep.subr.mxu0 0.0
    %455 = vmatpush2.msra.mxu0 0.0
    %456 = vmatprep.subr.mxu0 0.0
    %457 = vmatpush2.msra.mxu0 0.0
    %458 = vmatprep.subr.mxu0 0.0
    %459 = vmatpush2.msra.mxu0 0.0
    %460 = vmatprep.subr.mxu0 0.0
    %461 = vmatpush2.msra.mxu0 0.0
    %462 = vmatprep.subr.mxu0 0.0
    %463 = vmatpush2.msra.mxu0 0.0
    %464 = vmatprep.subr.mxu0 0.0
    %465 = vmatpush2.msra.mxu0 0.0
    %466 = vmatprep.mubr.f32.mxu0 0.0
    %467 = vmatmul.mubr.f32.gmra.mxu0 %v400
    %v468 = vpop.f32.mrf.mxu0
    %v469 = vadd.f32 0.0, %v468
    %v470 = vpop.f32.mrf.mxu0
    %471 = vmatprep.mubr.f32.mxu0 0.0
    %472 = vmatmul.mubr.f32.gmra.mxu0 %v400
    %v473 = vpop.f32.mrf.mxu0
    %v474 = vpop.f32.mrf.mxu0
    %v475 = vadd.f32 0.0, %v474
    %476 = vdwg.mxu0
    %v477 = vadd.f32 %v393, %v469
    %v478 = vadd.f32 %v397, %v475
    %v479 = vxor.u32 %v477, 2147483648
    %v480 = vxor.u32 %v478, 2147483648
    %v481 = vmul.f32 %v479, 1.442695
    %v482 = vpow.pop %v481
    %v483 = vmul.f32 %v480, 1.442695
    %v484 = vpow.pop %v483
    %v485 = vadd.f32 %v482, 1.0
    %v486 = vadd.f32 %v484, 1.0
    %v487 = vrcp.pop %v485
    %v488 = vmul.f32 1.0, %v487
    %v489 = vrcp.pop %v486
    %v490 = vmul.f32 1.0, %v489
    %v491 = vtanh.pop %v477
    %v492 = vtanh.pop %v478
    %v493 = vmul.f32 %v488, 0.0
    %v494 = vmul.f32 %v490, 0.0
    %497 = vrot.lane.b32.xlu0 %v491, 64
    %v498 = vpop.permute.xlu0 %497
    %499 = vrot.lane.b32.xlu0 %v492, 64
    %v500 = vpop.permute.xlu0 %499
    %v503 = vmul.f32 %v488, %v498
    %v504 = vmul.f32 %v490, %v500
    %507 = vrot.lane.b32.xlu0 %v503, 32
    %v508 = vpop.permute.xlu0 %507
    %509 = vrot.lane.b32.xlu0 %v504, 32
    %v510 = vpop.permute.xlu0 %509
    %v513 = vadd.f32 %v493, %v508
    %v514 = vadd.f32 %v494, %v510
    %v515 = vtanh.pop %v513
    %v516 = vtanh.pop %v514
    %519 = vrot.lane.b32.xlu0 %v515, 64
    %v520 = vpop.permute.xlu0 %519
    %521 = vrot.lane.b32.xlu0 %v516, 64
    %v522 = vpop.permute.xlu0 %521
    %v525 = vmul.f32 %v488, %v520
    %v526 = vmul.f32 %v490, %v522
    %528 = vrot.lane.b32.xlu0 %v525, 32
    %v529 = vpop.permute.xlu0 %528
    %531 = vst.msk [vmem:[#allocation3] sm:$0xff] %vm398, %v529
    %533 = vrot.lane.b32.xlu0 %v526, 64
    %v534 = vpop.permute.xlu0 %533
    %s536 = scalar_lea.vmem [#allocation3], 56
    %vm537 = vcmask 523520
    %538 = vst.msk [vmem:[%s536] sm:$0xff] %vm537, %v534
    %s539 = smul.u32 1, 2
    %s540 = smul.addr %s539, 8
    %s541 = scalar_lea.vmem [#allocation2], %s540
    %v542 = vld [vmem:[%s541] sm:$0xff]
    %s543 = smul.u32 6, 2
    %s544 = smul.addr %s543, 8
    %s545 = scalar_lea.vmem [#allocation2], %s544
    %v546 = vld [vmem:[%s545 + $0x8] sm:$0xff]
    %547 = vrot.lane.b32.xlu0 %v526, 32
    %v548 = vpop.permute.xlu0 %547
    %v549 = vsel %vm398, %v529, 0
    %v551 = vsel %vm398, %v548, 0
    %553 = vmatprep.subr.mxu0 0.0
    %554 = vmatpush1.msra.mxu0 0.0
    %555 = vmatprep.subr.mxu0 0.0
    %556 = vmatpush1.msra.mxu0 0.0
    %557 = vmatprep.subr.mxu0 0.0
    %558 = vmatpush1.msra.mxu0 0.0
    %559 = vmatprep.subr.mxu0 0.0
    %560 = vmatpush1.msra.mxu0 0.0
    %561 = vmatprep.subr.mxu0 0.0
    %562 = vmatpush1.msra.mxu0 0.0
    %563 = vmatprep.subr.mxu0 0.0
    %564 = vmatpush1.msra.mxu0 0.0
    %565 = vmatprep.subr.mxu0 0.0
    %566 = vmatpush1.msra.mxu0 0.0
    %567 = vmatprep.subr.mxu0 0.0
    %568 = vmatpush1.msra.mxu0 0.0
    %569 = vmatprep.subr.mxu0 0.0
    %570 = vmatpush1.msra.mxu0 0.0
    %571 = vmatprep.subr.mxu0 0.0
    %572 = vmatpush1.msra.mxu0 0.0
    %573 = vmatprep.subr.mxu0 0.0
    %574 = vmatpush1.msra.mxu0 0.0
    %575 = vmatprep.subr.mxu0 0.0
    %576 = vmatpush1.msra.mxu0 0.0
    %577 = vmatprep.subr.mxu0 %v389
    %578 = vmatpush1.msra.mxu0 %v388
    %579 = vmatprep.subr.mxu0 %v387
    %580 = vmatpush1.msra.mxu0 %v386
    %581 = vmatprep.subr.mxu0 %v385
    %582 = vmatpush1.msra.mxu0 %v384
    %583 = vmatprep.subr.mxu0 %v383
    %584 = vmatpush1.msra.mxu0 %v382
    %585 = vmatprep.subr.mxu0 0.0
    %586 = vmatpush2.msra.mxu0 0.0
    %587 = vmatprep.subr.mxu0 0.0
    %588 = vmatpush2.msra.mxu0 0.0
    %589 = vmatprep.subr.mxu0 0.0
    %590 = vmatpush2.msra.mxu0 0.0
    %591 = vmatprep.subr.mxu0 0.0
    %592 = vmatpush2.msra.mxu0 0.0
    %593 = vmatprep.subr.mxu0 0.0
    %594 = vmatpush2.msra.mxu0 0.0
    %595 = vmatprep.subr.mxu0 0.0
    %596 = vmatpush2.msra.mxu0 0.0
    %597 = vmatprep.subr.mxu0 0.0
    %598 = vmatpush2.msra.mxu0 0.0
    %599 = vmatprep.subr.mxu0 0.0
    %600 = vmatpush2.msra.mxu0 0.0
    %601 = vmatprep.subr.mxu0 0.0
    %602 = vmatpush2.msra.mxu0 0.0
    %603 = vmatprep.subr.mxu0 0.0
    %604 = vmatpush2.msra.mxu0 0.0
    %605 = vmatprep.subr.mxu0 0.0
    %606 = vmatpush2.msra.mxu0 0.0
    %607 = vmatprep.subr.mxu0 0.0
    %608 = vmatpush2.msra.mxu0 0.0
    %609 = vmatprep.subr.mxu0 0.0
    %610 = vmatpush2.msra.mxu0 0.0
    %611 = vmatprep.subr.mxu0 0.0
    %612 = vmatpush2.msra.mxu0 0.0
    %613 = vmatprep.subr.mxu0 0.0
    %614 = vmatpush2.msra.mxu0 0.0
    %615 = vmatprep.subr.mxu0 0.0
    %616 = vmatpush2.msra.mxu0 0.0
    %617 = vmatprep.mubr.f32.mxu0 0.0
    %618 = vmatmul.mubr.f32.gmra.mxu0 %v549
    %v619 = vpop.f32.mrf.mxu0
    %v620 = vadd.f32 0.0, %v619
    %v621 = vpop.f32.mrf.mxu0
    %622 = vmatprep.mubr.f32.mxu0 0.0
    %623 = vmatmul.mubr.f32.gmra.mxu0 %v551
    %v624 = vpop.f32.mrf.mxu0
    %v625 = vpop.f32.mrf.mxu0
    %v626 = vadd.f32 0.0, %v625
    %627 = vdwg.mxu0
    %v628 = vadd.f32 %v542, %v620
    %v629 = vadd.f32 %v546, %v626
    %v630 = vxor.u32 %v628, 2147483648
    %v631 = vxor.u32 %v629, 2147483648
    %v632 = vmul.f32 %v630, 1.442695
    %v633 = vpow.pop %v632
    %v634 = vmul.f32 %v631, 1.442695
    %v635 = vpow.pop %v634
    %v636 = vadd.f32 %v633, 1.0
    %v637 = vadd.f32 %v635, 1.0
    %v638 = vrcp.pop %v636
    %v639 = vmul.f32 1.0, %v638
    %v640 = vrcp.pop %v637
    %v641 = vmul.f32 1.0, %v640
    %v642 = vtanh.pop %v628
    %v643 = vtanh.pop %v629
    %v644 = vmul.f32 %v639, %v513
    %v645 = vmul.f32 %v641, %v514
    %648 = vrot.lane.b32.xlu0 %v642, 64
    %v649 = vpop.permute.xlu0 %648
    %650 = vrot.lane.b32.xlu0 %v643, 64
    %v651 = vpop.permute.xlu0 %650
    %v654 = vmul.f32 %v639, %v649
    %v655 = vmul.f32 %v641, %v651
    %658 = vrot.lane.b32.xlu0 %v654, 32
    %v659 = vpop.permute.xlu0 %658
    %660 = vrot.lane.b32.xlu0 %v655, 32
    %v661 = vpop.permute.xlu0 %660
    %v664 = vadd.f32 %v644, %v659
    %v665 = vadd.f32 %v645, %v661
    %v666 = vtanh.pop %v664
    %v667 = vtanh.pop %v665
    %670 = vrot.lane.b32.xlu0 %v666, 64
    %v671 = vpop.permute.xlu0 %670
    %672 = vrot.lane.b32.xlu0 %v667, 64
    %v673 = vpop.permute.xlu0 %672
    %v676 = vmul.f32 %v639, %v671
    %v677 = vmul.f32 %v641, %v673
    %679 = vrot.lane.b32.xlu0 %v676, 32
    %v680 = vpop.permute.xlu0 %679
    %s682 = scalar_lea.vmem [#allocation3], 8
    %683 = vst.msk [vmem:[%s682] sm:$0xff] %vm398, %v680
    %685 = vrot.lane.b32.xlu0 %v677, 64
    %v686 = vpop.permute.xlu0 %685
    %s688 = scalar_lea.vmem [#allocation3], 48
    %689 = vst.msk [vmem:[%s688] sm:$0xff] %vm537, %v686
    %s690 = smul.u32 2, 2
    %s691 = smul.addr %s690, 8
    %s692 = scalar_lea.vmem [#allocation2], %s691
    %v693 = vld [vmem:[%s692] sm:$0xff]
    %s694 = smul.u32 5, 2
    %s695 = smul.addr %s694, 8
    %s696 = scalar_lea.vmem [#allocation2], %s695
    %v697 = vld [vmem:[%s696 + $0x8] sm:$0xff]
    %698 = vrot.lane.b32.xlu0 %v677, 32
    %v699 = vpop.permute.xlu0 %698
    %v700 = vsel %vm398, %v680, 0
    %v702 = vsel %vm398, %v699, 0
    %704 = vmatprep.subr.mxu0 0.0
    %705 = vmatpush1.msra.mxu0 0.0
    %706 = vmatprep.subr.mxu0 0.0
    %707 = vmatpush1.msra.mxu0 0.0
    %708 = vmatprep.subr.mxu0 0.0
    %709 = vmatpush1.msra.mxu0 0.0
    %710 = vmatprep.subr.mxu0 0.0
    %711 = vmatpush1.msra.mxu0 0.0
    %712 = vmatprep.subr.mxu0 0.0
    %713 = vmatpush1.msra.mxu0 0.0
    %714 = vmatprep.subr.mxu0 0.0
    %715 = vmatpush1.msra.mxu0 0.0
    %716 = vmatprep.subr.mxu0 0.0
    %717 = vmatpush1.msra.mxu0 0.0
    %718 = vmatprep.subr.mxu0 0.0
    %719 = vmatpush1.msra.mxu0 0.0
    %720 = vmatprep.subr.mxu0 0.0
    %721 = vmatpush1.msra.mxu0 0.0
    %722 = vmatprep.subr.mxu0 0.0
    %723 = vmatpush1.msra.mxu0 0.0
    %724 = vmatprep.subr.mxu0 0.0
    %725 = vmatpush1.msra.mxu0 0.0
    %726 = vmatprep.subr.mxu0 0.0
    %727 = vmatpush1.msra.mxu0 0.0
    %728 = vmatprep.subr.mxu0 %v389
    %729 = vmatpush1.msra.mxu0 %v388
    %730 = vmatprep.subr.mxu0 %v387
    %731 = vmatpush1.msra.mxu0 %v386
    %732 = vmatprep.subr.mxu0 %v385
    %733 = vmatpush1.msra.mxu0 %v384
    %734 = vmatprep.subr.mxu0 %v383
    %735 = vmatpush1.msra.mxu0 %v382
    %736 = vmatprep.subr.mxu0 0.0
    %737 = vmatpush2.msra.mxu0 0.0
    %738 = vmatprep.subr.mxu0 0.0
    %739 = vmatpush2.msra.mxu0 0.0
    %740 = vmatprep.subr.mxu0 0.0
    %741 = vmatpush2.msra.mxu0 0.0
    %742 = vmatprep.subr.mxu0 0.0
    %743 = vmatpush2.msra.mxu0 0.0
    %744 = vmatprep.subr.mxu0 0.0
    %745 = vmatpush2.msra.mxu0 0.0
    %746 = vmatprep.subr.mxu0 0.0
    %747 = vmatpush2.msra.mxu0 0.0
    %748 = vmatprep.subr.mxu0 0.0
    %749 = vmatpush2.msra.mxu0 0.0
    %750 = vmatprep.subr.mxu0 0.0
    %751 = vmatpush2.msra.mxu0 0.0
    %752 = vmatprep.subr.mxu0 0.0
    %753 = vmatpush2.msra.mxu0 0.0
    %754 = vmatprep.subr.mxu0 0.0
    %755 = vmatpush2.msra.mxu0 0.0
    %756 = vmatprep.subr.mxu0 0.0
    %757 = vmatpush2.msra.mxu0 0.0
    %758 = vmatprep.subr.mxu0 0.0
    %759 = vmatpush2.msra.mxu0 0.0
    %760 = vmatprep.subr.mxu0 0.0
    %761 = vmatpush2.msra.mxu0 0.0
    %762 = vmatprep.subr.mxu0 0.0
    %763 = vmatpush2.msra.mxu0 0.0
    %764 = vmatprep.subr.mxu0 0.0
    %765 = vmatpush2.msra.mxu0 0.0
    %766 = vmatprep.subr.mxu0 0.0
    %767 = vmatpush2.msra.mxu0 0.0
    %768 = vmatprep.mubr.f32.mxu0 0.0
    %769 = vmatmul.mubr.f32.gmra.mxu0 %v700
    %v770 = vpop.f32.mrf.mxu0
    %v771 = vadd.f32 0.0, %v770
    %v772 = vpop.f32.mrf.mxu0
    %773 = vmatprep.mubr.f32.mxu0 0.0
    %774 = vmatmul.mubr.f32.gmra.mxu0 %v702
    %v775 = vpop.f32.mrf.mxu0
    %v776 = vpop.f32.mrf.mxu0
    %v777 = vadd.f32 0.0, %v776
    %778 = vdwg.mxu0
    %v779 = vadd.f32 %v693, %v771
    %v780 = vadd.f32 %v697, %v777
    %v781 = vxor.u32 %v779, 2147483648
    %v782 = vxor.u32 %v780, 2147483648
    %v783 = vmul.f32 %v781, 1.442695
    %v784 = vpow.pop %v783
    %v785 = vmul.f32 %v782, 1.442695
    %v786 = vpow.pop %v785
    %v787 = vadd.f32 %v784, 1.0
    %v788 = vadd.f32 %v786, 1.0
    %v789 = vrcp.pop %v787
    %v790 = vmul.f32 1.0, %v789
    %v791 = vrcp.pop %v788
    %v792 = vmul.f32 1.0, %v791
    %v793 = vtanh.pop %v779
    %v794 = vtanh.pop %v780
    %v795 = vmul.f32 %v790, %v664
    %v796 = vmul.f32 %v792, %v665
    %799 = vrot.lane.b32.xlu0 %v793, 64
    %v800 = vpop.permute.xlu0 %799
    %801 = vrot.lane.b32.xlu0 %v794, 64
    %v802 = vpop.permute.xlu0 %801
    %v805 = vmul.f32 %v790, %v800
    %v806 = vmul.f32 %v792, %v802
    %809 = vrot.lane.b32.xlu0 %v805, 32
    %v810 = vpop.permute.xlu0 %809
    %811 = vrot.lane.b32.xlu0 %v806, 32
    %v812 = vpop.permute.xlu0 %811
    %v815 = vadd.f32 %v795, %v810
    %v816 = vadd.f32 %v796, %v812
    %v817 = vtanh.pop %v815
    %v818 = vtanh.pop %v816
    %821 = vrot.lane.b32.xlu0 %v817, 64
    %v822 = vpop.permute.xlu0 %821
    %823 = vrot.lane.b32.xlu0 %v818, 64
    %v824 = vpop.permute.xlu0 %823
    %v827 = vmul.f32 %v790, %v822
    %v828 = vmul.f32 %v792, %v824
    %830 = vrot.lane.b32.xlu0 %v827, 32
    %v831 = vpop.permute.xlu0 %830
    %s833 = scalar_lea.vmem [#allocation3], 16
    %834 = vst.msk [vmem:[%s833] sm:$0xff] %vm398, %v831
    %836 = vrot.lane.b32.xlu0 %v828, 64
    %v837 = vpop.permute.xlu0 %836
    %s839 = scalar_lea.vmem [#allocation3], 40
    %840 = vst.msk [vmem:[%s839] sm:$0xff] %vm537, %v837
    %s841 = smul.u32 3, 2
    %s842 = smul.addr %s841, 8
    %s843 = scalar_lea.vmem [#allocation2], %s842
    %v844 = vld [vmem:[%s843] sm:$0xff]
    %s845 = smul.u32 4, 2
    %s846 = smul.addr %s845, 8
    %s847 = scalar_lea.vmem [#allocation2], %s846
    %v848 = vld [vmem:[%s847 + $0x8] sm:$0xff]
    %849 = vrot.lane.b32.xlu0 %v828, 32
    %v850 = vpop.permute.xlu0 %849
    %v851 = vsel %vm398, %v831, 0
    %v853 = vsel %vm398, %v850, 0
    %855 = vmatprep.subr.mxu0 0.0
    %856 = vmatpush1.msra.mxu0 0.0
    %857 = vmatprep.subr.mxu0 0.0
    %858 = vmatpush1.msra.mxu0 0.0
    %859 = vmatprep.subr.mxu0 0.0
    %860 = vmatpush1.msra.mxu0 0.0
    %861 = vmatprep.subr.mxu0 0.0
    %862 = vmatpush1.msra.mxu0 0.0
    %863 = vmatprep.subr.mxu0 0.0
    %864 = vmatpush1.msra.mxu0 0.0
    %865 = vmatprep.subr.mxu0 0.0
    %866 = vmatpush1.msra.mxu0 0.0
    %867 = vmatprep.subr.mxu0 0.0
    %868 = vmatpush1.msra.mxu0 0.0
    %869 = vmatprep.subr.mxu0 0.0
    %870 = vmatpush1.msra.mxu0 0.0
    %871 = vmatprep.subr.mxu0 0.0
    %872 = vmatpush1.msra.mxu0 0.0
    %873 = vmatprep.subr.mxu0 0.0
    %874 = vmatpush1.msra.mxu0 0.0
    %875 = vmatprep.subr.mxu0 0.0
    %876 = vmatpush1.msra.mxu0 0.0
    %877 = vmatprep.subr.mxu0 0.0
    %878 = vmatpush1.msra.mxu0 0.0
    %879 = vmatprep.subr.mxu0 %v389
    %880 = vmatpush1.msra.mxu0 %v388
    %881 = vmatprep.subr.mxu0 %v387
    %882 = vmatpush1.msra.mxu0 %v386
    %883 = vmatprep.subr.mxu0 %v385
    %884 = vmatpush1.msra.mxu0 %v384
    %885 = vmatprep.subr.mxu0 %v383
    %886 = vmatpush1.msra.mxu0 %v382
    %887 = vmatprep.subr.mxu0 0.0
    %888 = vmatpush2.msra.mxu0 0.0
    %889 = vmatprep.subr.mxu0 0.0
    %890 = vmatpush2.msra.mxu0 0.0
    %891 = vmatprep.subr.mxu0 0.0
    %892 = vmatpush2.msra.mxu0 0.0
    %893 = vmatprep.subr.mxu0 0.0
    %894 = vmatpush2.msra.mxu0 0.0
    %895 = vmatprep.subr.mxu0 0.0
    %896 = vmatpush2.msra.mxu0 0.0
    %897 = vmatprep.subr.mxu0 0.0
    %898 = vmatpush2.msra.mxu0 0.0
    %899 = vmatprep.subr.mxu0 0.0
    %900 = vmatpush2.msra.mxu0 0.0
    %901 = vmatprep.subr.mxu0 0.0
    %902 = vmatpush2.msra.mxu0 0.0
    %903 = vmatprep.subr.mxu0 0.0
    %904 = vmatpush2.msra.mxu0 0.0
    %905 = vmatprep.subr.mxu0 0.0
    %906 = vmatpush2.msra.mxu0 0.0
    %907 = vmatprep.subr.mxu0 0.0
    %908 = vmatpush2.msra.mxu0 0.0
    %909 = vmatprep.subr.mxu0 0.0
    %910 = vmatpush2.msra.mxu0 0.0
    %911 = vmatprep.subr.mxu0 0.0
    %912 = vmatpush2.msra.mxu0 0.0
    %913 = vmatprep.subr.mxu0 0.0
    %914 = vmatpush2.msra.mxu0 0.0
    %915 = vmatprep.subr.mxu0 0.0
    %916 = vmatpush2.msra.mxu0 0.0
    %917 = vmatprep.subr.mxu0 0.0
    %918 = vmatpush2.msra.mxu0 0.0
    %919 = vmatprep.mubr.f32.mxu0 0.0
    %920 = vmatmul.mubr.f32.gmra.mxu0 %v851
    %v921 = vpop.f32.mrf.mxu0
    %v922 = vadd.f32 0.0, %v921
    %v923 = vpop.f32.mrf.mxu0
    %924 = vmatprep.mubr.f32.mxu0 0.0
    %925 = vmatmul.mubr.f32.gmra.mxu0 %v853
    %v926 = vpop.f32.mrf.mxu0
    %v927 = vpop.f32.mrf.mxu0
    %v928 = vadd.f32 0.0, %v927
    %929 = vdwg.mxu0
    %v930 = vadd.f32 %v844, %v922
    %v931 = vadd.f32 %v848, %v928
    %v932 = vxor.u32 %v930, 2147483648
    %v933 = vxor.u32 %v931, 2147483648
    %v934 = vmul.f32 %v932, 1.442695
    %v935 = vpow.pop %v934
    %v936 = vmul.f32 %v933, 1.442695
    %v937 = vpow.pop %v936
    %v938 = vadd.f32 %v935, 1.0
    %v939 = vadd.f32 %v937, 1.0
    %v940 = vrcp.pop %v938
    %v941 = vmul.f32 1.0, %v940
    %v942 = vrcp.pop %v939
    %v943 = vmul.f32 1.0, %v942
    %v944 = vtanh.pop %v930
    %v945 = vtanh.pop %v931
    %v946 = vmul.f32 %v941, %v815
    %v947 = vmul.f32 %v943, %v816
    %950 = vrot.lane.b32.xlu0 %v944, 64
    %v951 = vpop.permute.xlu0 %950
    %952 = vrot.lane.b32.xlu0 %v945, 64
    %v953 = vpop.permute.xlu0 %952
    %v956 = vmul.f32 %v941, %v951
    %v957 = vmul.f32 %v943, %v953
    %960 = vrot.lane.b32.xlu0 %v956, 32
    %v961 = vpop.permute.xlu0 %960
    %962 = vrot.lane.b32.xlu0 %v957, 32
    %v963 = vpop.permute.xlu0 %962
    %v966 = vadd.f32 %v946, %v961
    %v967 = vadd.f32 %v947, %v963
    %v968 = vtanh.pop %v966
    %v969 = vtanh.pop %v967
    %972 = vrot.lane.b32.xlu0 %v968, 64
    %v973 = vpop.permute.xlu0 %972
    %974 = vrot.lane.b32.xlu0 %v969, 64
    %v975 = vpop.permute.xlu0 %974
    %v978 = vmul.f32 %v941, %v973
    %v979 = vmul.f32 %v943, %v975
    %981 = vrot.lane.b32.xlu0 %v978, 32
    %v982 = vpop.permute.xlu0 %981
    %s984 = scalar_lea.vmem [#allocation3], 24
    %985 = vst.msk [vmem:[%s984] sm:$0xff] %vm398, %v982
    %987 = vrot.lane.b32.xlu0 %v979, 64
    %v988 = vpop.permute.xlu0 %987
    %s990 = scalar_lea.vmem [#allocation3], 32
    %991 = vst.msk [vmem:[%s990] sm:$0xff] %vm537, %v988
    %v992 = vld [vmem:[%s847] sm:$0xff]
    %v993 = vld [vmem:[%s843 + $0x8] sm:$0xff]
    %994 = vrot.lane.b32.xlu0 %v979, 32
    %v995 = vpop.permute.xlu0 %994
    %v996 = vsel %vm398, %v982, 0
    %v998 = vsel %vm398, %v995, 0
    %1000 = vmatprep.subr.mxu0 0.0
    %1001 = vmatpush1.msra.mxu0 0.0
    %1002 = vmatprep.subr.mxu0 0.0
    %1003 = vmatpush1.msra.mxu0 0.0
    %1004 = vmatprep.subr.mxu0 0.0
    %1005 = vmatpush1.msra.mxu0 0.0
    %1006 = vmatprep.subr.mxu0 0.0
    %1007 = vmatpush1.msra.mxu0 0.0
    %1008 = vmatprep.subr.mxu0 0.0
    %1009 = vmatpush1.msra.mxu0 0.0
    %1010 = vmatprep.subr.mxu0 0.0
    %1011 = vmatpush1.msra.mxu0 0.0
    %1012 = vmatprep.subr.mxu0 0.0
    %1013 = vmatpush1.msra.mxu0 0.0
    %1014 = vmatprep.subr.mxu0 0.0
    %1015 = vmatpush1.msra.mxu0 0.0
    %1016 = vmatprep.subr.mxu0 0.0
    %1017 = vmatpush1.msra.mxu0 0.0
    %1018 = vmatprep.subr.mxu0 0.0
    %1019 = vmatpush1.msra.mxu0 0.0
    %1020 = vmatprep.subr.mxu0 0.0
    %1021 = vmatpush1.msra.mxu0 0.0
    %1022 = vmatprep.subr.mxu0 0.0
    %1023 = vmatpush1.msra.mxu0 0.0
    %1024 = vmatprep.subr.mxu0 %v389
    %1025 = vmatpush1.msra.mxu0 %v388
    %1026 = vmatprep.subr.mxu0 %v387
    %1027 = vmatpush1.msra.mxu0 %v386
    %1028 = vmatprep.subr.mxu0 %v385
    %1029 = vmatpush1.msra.mxu0 %v384
    %1030 = vmatprep.subr.mxu0 %v383
    %1031 = vmatpush1.msra.mxu0 %v382
    %1032 = vmatprep.subr.mxu0 0.0
    %1033 = vmatpush2.msra.mxu0 0.0
    %1034 = vmatprep.subr.mxu0 0.0
    %1035 = vmatpush2.msra.mxu0 0.0
    %1036 = vmatprep.subr.mxu0 0.0
    %1037 = vmatpush2.msra.mxu0 0.0
    %1038 = vmatprep.subr.mxu0 0.0
    %1039 = vmatpush2.msra.mxu0 0.0
    %1040 = vmatprep.subr.mxu0 0.0
    %1041 = vmatpush2.msra.mxu0 0.0
    %1042 = vmatprep.subr.mxu0 0.0
    %1043 = vmatpush2.msra.mxu0 0.0
    %1044 = vmatprep.subr.mxu0 0.0
    %1045 = vmatpush2.msra.mxu0 0.0
    %1046 = vmatprep.subr.mxu0 0.0
    %1047 = vmatpush2.msra.mxu0 0.0
    %1048 = vmatprep.subr.mxu0 0.0
    %1049 = vmatpush2.msra.mxu0 0.0
    %1050 = vmatprep.subr.mxu0 0.0
    %1051 = vmatpush2.msra.mxu0 0.0
    %1052 = vmatprep.subr.mxu0 0.0
    %1053 = vmatpush2.msra.mxu0 0.0
    %1054 = vmatprep.subr.mxu0 0.0
    %1055 = vmatpush2.msra.mxu0 0.0
    %1056 = vmatprep.subr.mxu0 0.0
    %1057 = vmatpush2.msra.mxu0 0.0
    %1058 = vmatprep.subr.mxu0 0.0
    %1059 = vmatpush2.msra.mxu0 0.0
    %1060 = vmatprep.subr.mxu0 0.0
    %1061 = vmatpush2.msra.mxu0 0.0
    %1062 = vmatprep.subr.mxu0 0.0
    %1063 = vmatpush2.msra.mxu0 0.0
    %1064 = vmatprep.mubr.f32.mxu0 0.0
    %1065 = vmatmul.mubr.f32.gmra.mxu0 %v996
    %v1066 = vpop.f32.mrf.mxu0
    %v1067 = vadd.f32 0.0, %v1066
    %v1068 = vpop.f32.mrf.mxu0
    %1069 = vmatprep.mubr.f32.mxu0 0.0
    %1070 = vmatmul.mubr.f32.gmra.mxu0 %v998
    %v1071 = vpop.f32.mrf.mxu0
    %v1072 = vpop.f32.mrf.mxu0
    %v1073 = vadd.f32 0.0, %v1072
    %1074 = vdwg.mxu0
    %v1075 = vadd.f32 %v992, %v1067
    %v1076 = vadd.f32 %v993, %v1073
    %v1077 = vxor.u32 %v1075, 2147483648
    %v1078 = vxor.u32 %v1076, 2147483648
    %v1079 = vmul.f32 %v1077, 1.442695
    %v1080 = vpow.pop %v1079
    %v1081 = vmul.f32 %v1078, 1.442695
    %v1082 = vpow.pop %v1081
    %v1083 = vadd.f32 %v1080, 1.0
    %v1084 = vadd.f32 %v1082, 1.0
    %v1085 = vrcp.pop %v1083
    %v1086 = vmul.f32 1.0, %v1085
    %v1087 = vrcp.pop %v1084
    %v1088 = vmul.f32 1.0, %v1087
    %v1089 = vtanh.pop %v1075
    %v1090 = vtanh.pop %v1076
    %v1091 = vmul.f32 %v1086, %v966
    %v1092 = vmul.f32 %v1088, %v967
    %1095 = vrot.lane.b32.xlu0 %v1089, 64
    %v1096 = vpop.permute.xlu0 %1095
    %1097 = vrot.lane.b32.xlu0 %v1090, 64
    %v1098 = vpop.permute.xlu0 %1097
    %v1101 = vmul.f32 %v1086, %v1096
    %v1102 = vmul.f32 %v1088, %v1098
    %1105 = vrot.lane.b32.xlu0 %v1101, 32
    %v1106 = vpop.permute.xlu0 %1105
    %1107 = vrot.lane.b32.xlu0 %v1102, 32
    %v1108 = vpop.permute.xlu0 %1107
    %v1111 = vadd.f32 %v1091, %v1106
    %v1112 = vadd.f32 %v1092, %v1108
    %v1113 = vtanh.pop %v1111
    %v1114 = vtanh.pop %v1112
    %1117 = vrot.lane.b32.xlu0 %v1113, 64
    %v1118 = vpop.permute.xlu0 %1117
    %1119 = vrot.lane.b32.xlu0 %v1114, 64
    %v1120 = vpop.permute.xlu0 %1119
    %v1123 = vmul.f32 %v1086, %v1118
    %v1124 = vmul.f32 %v1088, %v1120
    %1126 = vrot.lane.b32.xlu0 %v1123, 32
    %v1127 = vpop.permute.xlu0 %1126
    %1129 = vst.msk [vmem:[%s990] sm:$0xff] %vm398, %v1127
    %1131 = vrot.lane.b32.xlu0 %v1124, 64
    %v1132 = vpop.permute.xlu0 %1131
    %1134 = vst.msk [vmem:[%s984] sm:$0xff] %vm537, %v1132
    %v1135 = vld [vmem:[%s696] sm:$0xff]
    %v1136 = vld [vmem:[%s692 + $0x8] sm:$0xff]
    %1137 = vrot.lane.b32.xlu0 %v1124, 32
    %v1138 = vpop.permute.xlu0 %1137
    %v1139 = vsel %vm398, %v1127, 0
    %v1141 = vsel %vm398, %v1138, 0
    %1143 = vmatprep.subr.mxu0 0.0
    %1144 = vmatpush1.msra.mxu0 0.0
    %1145 = vmatprep.subr.mxu0 0.0
    %1146 = vmatpush1.msra.mxu0 0.0
    %1147 = vmatprep.subr.mxu0 0.0
    %1148 = vmatpush1.msra.mxu0 0.0
    %1149 = vmatprep.subr.mxu0 0.0
    %1150 = vmatpush1.msra.mxu0 0.0
    %1151 = vmatprep.subr.mxu0 0.0
    %1152 = vmatpush1.msra.mxu0 0.0
    %1153 = vmatprep.subr.mxu0 0.0
    %1154 = vmatpush1.msra.mxu0 0.0
    %1155 = vmatprep.subr.mxu0 0.0
    %1156 = vmatpush1.msra.mxu0 0.0
    %1157 = vmatprep.subr.mxu0 0.0
    %1158 = vmatpush1.msra.mxu0 0.0
    %1159 = vmatprep.subr.mxu0 0.0
    %1160 = vmatpush1.msra.mxu0 0.0
    %1161 = vmatprep.subr.mxu0 0.0
    %1162 = vmatpush1.msra.mxu0 0.0
    %1163 = vmatprep.subr.mxu0 0.0
    %1164 = vmatpush1.msra.mxu0 0.0
    %1165 = vmatprep.subr.mxu0 0.0
    %1166 = vmatpush1.msra.mxu0 0.0
    %1167 = vmatprep.subr.mxu0 %v389
    %1168 = vmatpush1.msra.mxu0 %v388
    %1169 = vmatprep.subr.mxu0 %v387
    %1170 = vmatpush1.msra.mxu0 %v386
    %1171 = vmatprep.subr.mxu0 %v385
    %1172 = vmatpush1.msra.mxu0 %v384
    %1173 = vmatprep.subr.mxu0 %v383
    %1174 = vmatpush1.msra.mxu0 %v382
    %1175 = vmatprep.subr.mxu0 0.0
    %1176 = vmatpush2.msra.mxu0 0.0
    %1177 = vmatprep.subr.mxu0 0.0
    %1178 = vmatpush2.msra.mxu0 0.0
    %1179 = vmatprep.subr.mxu0 0.0
    %1180 = vmatpush2.msra.mxu0 0.0
    %1181 = vmatprep.subr.mxu0 0.0
    %1182 = vmatpush2.msra.mxu0 0.0
    %1183 = vmatprep.subr.mxu0 0.0
    %1184 = vmatpush2.msra.mxu0 0.0
    %1185 = vmatprep.subr.mxu0 0.0
    %1186 = vmatpush2.msra.mxu0 0.0
    %1187 = vmatprep.subr.mxu0 0.0
    %1188 = vmatpush2.msra.mxu0 0.0
    %1189 = vmatprep.subr.mxu0 0.0
    %1190 = vmatpush2.msra.mxu0 0.0
    %1191 = vmatprep.subr.mxu0 0.0
    %1192 = vmatpush2.msra.mxu0 0.0
    %1193 = vmatprep.subr.mxu0 0.0
    %1194 = vmatpush2.msra.mxu0 0.0
    %1195 = vmatprep.subr.mxu0 0.0
    %1196 = vmatpush2.msra.mxu0 0.0
    %1197 = vmatprep.subr.mxu0 0.0
    %1198 = vmatpush2.msra.mxu0 0.0
    %1199 = vmatprep.subr.mxu0 0.0
    %1200 = vmatpush2.msra.mxu0 0.0
    %1201 = vmatprep.subr.mxu0 0.0
    %1202 = vmatpush2.msra.mxu0 0.0
    %1203 = vmatprep.subr.mxu0 0.0
    %1204 = vmatpush2.msra.mxu0 0.0
    %1205 = vmatprep.subr.mxu0 0.0
    %1206 = vmatpush2.msra.mxu0 0.0
    %1207 = vmatprep.mubr.f32.mxu0 0.0
    %1208 = vmatmul.mubr.f32.gmra.mxu0 %v1139
    %v1209 = vpop.f32.mrf.mxu0
    %v1210 = vadd.f32 0.0, %v1209
    %v1211 = vpop.f32.mrf.mxu0
    %1212 = vmatprep.mubr.f32.mxu0 0.0
    %1213 = vmatmul.mubr.f32.gmra.mxu0 %v1141
    %v1214 = vpop.f32.mrf.mxu0
    %v1215 = vpop.f32.mrf.mxu0
    %v1216 = vadd.f32 0.0, %v1215
    %1217 = vdwg.mxu0
    %v1218 = vadd.f32 %v1135, %v1210
    %v1219 = vadd.f32 %v1136, %v1216
    %v1220 = vxor.u32 %v1218, 2147483648
    %v1221 = vxor.u32 %v1219, 2147483648
    %v1222 = vmul.f32 %v1220, 1.442695
    %v1223 = vpow.pop %v1222
    %v1224 = vmul.f32 %v1221, 1.442695
    %v1225 = vpow.pop %v1224
    %v1226 = vadd.f32 %v1223, 1.0
    %v1227 = vadd.f32 %v1225, 1.0
    %v1228 = vrcp.pop %v1226
    %v1229 = vmul.f32 1.0, %v1228
    %v1230 = vrcp.pop %v1227
    %v1231 = vmul.f32 1.0, %v1230
    %v1232 = vtanh.pop %v1218
    %v1233 = vtanh.pop %v1219
    %v1234 = vmul.f32 %v1229, %v1111
    %v1235 = vmul.f32 %v1231, %v1112
    %1238 = vrot.lane.b32.xlu0 %v1232, 64
    %v1239 = vpop.permute.xlu0 %1238
    %1240 = vrot.lane.b32.xlu0 %v1233, 64
    %v1241 = vpop.permute.xlu0 %1240
    %v1244 = vmul.f32 %v1229, %v1239
    %v1245 = vmul.f32 %v1231, %v1241
    %1248 = vrot.lane.b32.xlu0 %v1244, 32
    %v1249 = vpop.permute.xlu0 %1248
    %1250 = vrot.lane.b32.xlu0 %v1245, 32
    %v1251 = vpop.permute.xlu0 %1250
    %v1254 = vadd.f32 %v1234, %v1249
    %v1255 = vadd.f32 %v1235, %v1251
    %v1256 = vtanh.pop %v1254
    %v1257 = vtanh.pop %v1255
    %1260 = vrot.lane.b32.xlu0 %v1256, 64
    %v1261 = vpop.permute.xlu0 %1260
    %1262 = vrot.lane.b32.xlu0 %v1257, 64
    %v1263 = vpop.permute.xlu0 %1262
    %v1266 = vmul.f32 %v1229, %v1261
    %v1267 = vmul.f32 %v1231, %v1263
    %1269 = vrot.lane.b32.xlu0 %v1266, 32
    %v1270 = vpop.permute.xlu0 %1269
    %1272 = vst.msk [vmem:[%s839] sm:$0xff] %vm398, %v1270
    %1274 = vrot.lane.b32.xlu0 %v1267, 64
    %v1275 = vpop.permute.xlu0 %1274
    %1277 = vst.msk [vmem:[%s833] sm:$0xff] %vm537, %v1275
    %v1278 = vld [vmem:[%s545] sm:$0xff]
    %v1279 = vld [vmem:[%s541 + $0x8] sm:$0xff]
    %1280 = vrot.lane.b32.xlu0 %v1267, 32
    %v1281 = vpop.permute.xlu0 %1280
    %v1282 = vsel %vm398, %v1270, 0
    %v1284 = vsel %vm398, %v1281, 0
    %1286 = vmatprep.subr.mxu0 0.0
    %1287 = vmatpush1.msra.mxu0 0.0
    %1288 = vmatprep.subr.mxu0 0.0
    %1289 = vmatpush1.msra.mxu0 0.0
    %1290 = vmatprep.subr.mxu0 0.0
    %1291 = vmatpush1.msra.mxu0 0.0
    %1292 = vmatprep.subr.mxu0 0.0
    %1293 = vmatpush1.msra.mxu0 0.0
    %1294 = vmatprep.subr.mxu0 0.0
    %1295 = vmatpush1.msra.mxu0 0.0
    %1296 = vmatprep.subr.mxu0 0.0
    %1297 = vmatpush1.msra.mxu0 0.0
    %1298 = vmatprep.subr.mxu0 0.0
    %1299 = vmatpush1.msra.mxu0 0.0
    %1300 = vmatprep.subr.mxu0 0.0
    %1301 = vmatpush1.msra.mxu0 0.0
    %1302 = vmatprep.subr.mxu0 0.0
    %1303 = vmatpush1.msra.mxu0 0.0
    %1304 = vmatprep.subr.mxu0 0.0
    %1305 = vmatpush1.msra.mxu0 0.0
    %1306 = vmatprep.subr.mxu0 0.0
    %1307 = vmatpush1.msra.mxu0 0.0
    %1308 = vmatprep.subr.mxu0 0.0
    %1309 = vmatpush1.msra.mxu0 0.0
    %1310 = vmatprep.subr.mxu0 %v389
    %1311 = vmatpush1.msra.mxu0 %v388
    %1312 = vmatprep.subr.mxu0 %v387
    %1313 = vmatpush1.msra.mxu0 %v386
    %1314 = vmatprep.subr.mxu0 %v385
    %1315 = vmatpush1.msra.mxu0 %v384
    %1316 = vmatprep.subr.mxu0 %v383
    %1317 = vmatpush1.msra.mxu0 %v382
    %1318 = vmatprep.subr.mxu0 0.0
    %1319 = vmatpush2.msra.mxu0 0.0
    %1320 = vmatprep.subr.mxu0 0.0
    %1321 = vmatpush2.msra.mxu0 0.0
    %1322 = vmatprep.subr.mxu0 0.0
    %1323 = vmatpush2.msra.mxu0 0.0
    %1324 = vmatprep.subr.mxu0 0.0
    %1325 = vmatpush2.msra.mxu0 0.0
    %1326 = vmatprep.subr.mxu0 0.0
    %1327 = vmatpush2.msra.mxu0 0.0
    %1328 = vmatprep.subr.mxu0 0.0
    %1329 = vmatpush2.msra.mxu0 0.0
    %1330 = vmatprep.subr.mxu0 0.0
    %1331 = vmatpush2.msra.mxu0 0.0
    %1332 = vmatprep.subr.mxu0 0.0
    %1333 = vmatpush2.msra.mxu0 0.0
    %1334 = vmatprep.subr.mxu0 0.0
    %1335 = vmatpush2.msra.mxu0 0.0
    %1336 = vmatprep.subr.mxu0 0.0
    %1337 = vmatpush2.msra.mxu0 0.0
    %1338 = vmatprep.subr.mxu0 0.0
    %1339 = vmatpush2.msra.mxu0 0.0
    %1340 = vmatprep.subr.mxu0 0.0
    %1341 = vmatpush2.msra.mxu0 0.0
    %1342 = vmatprep.subr.mxu0 0.0
    %1343 = vmatpush2.msra.mxu0 0.0
    %1344 = vmatprep.subr.mxu0 0.0
    %1345 = vmatpush2.msra.mxu0 0.0
    %1346 = vmatprep.subr.mxu0 0.0
    %1347 = vmatpush2.msra.mxu0 0.0
    %1348 = vmatprep.subr.mxu0 0.0
    %1349 = vmatpush2.msra.mxu0 0.0
    %1350 = vmatprep.mubr.f32.mxu0 0.0
    %1351 = vmatmul.mubr.f32.gmra.mxu0 %v1282
    %v1352 = vpop.f32.mrf.mxu0
    %v1353 = vadd.f32 0.0, %v1352
    %v1354 = vpop.f32.mrf.mxu0
    %1355 = vmatprep.mubr.f32.mxu0 0.0
    %1356 = vmatmul.mubr.f32.gmra.mxu0 %v1284
    %v1357 = vpop.f32.mrf.mxu0
    %v1358 = vpop.f32.mrf.mxu0
    %v1359 = vadd.f32 0.0, %v1358
    %1360 = vdwg.mxu0
    %v1361 = vadd.f32 %v1278, %v1353
    %v1362 = vadd.f32 %v1279, %v1359
    %v1363 = vxor.u32 %v1361, 2147483648
    %v1364 = vxor.u32 %v1362, 2147483648
    %v1365 = vmul.f32 %v1363, 1.442695
    %v1366 = vpow.pop %v1365
    %v1367 = vmul.f32 %v1364, 1.442695
    %v1368 = vpow.pop %v1367
    %v1369 = vadd.f32 %v1366, 1.0
    %v1370 = vadd.f32 %v1368, 1.0
    %v1371 = vrcp.pop %v1369
    %v1372 = vmul.f32 1.0, %v1371
    %v1373 = vrcp.pop %v1370
    %v1374 = vmul.f32 1.0, %v1373
    %v1375 = vtanh.pop %v1361
    %v1376 = vtanh.pop %v1362
    %v1377 = vmul.f32 %v1372, %v1254
    %v1378 = vmul.f32 %v1374, %v1255
    %1381 = vrot.lane.b32.xlu0 %v1375, 64
    %v1382 = vpop.permute.xlu0 %1381
    %1383 = vrot.lane.b32.xlu0 %v1376, 64
    %v1384 = vpop.permute.xlu0 %1383
    %v1387 = vmul.f32 %v1372, %v1382
    %v1388 = vmul.f32 %v1374, %v1384
    %1391 = vrot.lane.b32.xlu0 %v1387, 32
    %v1392 = vpop.permute.xlu0 %1391
    %1393 = vrot.lane.b32.xlu0 %v1388, 32
    %v1394 = vpop.permute.xlu0 %1393
    %v1397 = vadd.f32 %v1377, %v1392
    %v1398 = vadd.f32 %v1378, %v1394
    %v1399 = vtanh.pop %v1397
    %v1400 = vtanh.pop %v1398
    %1403 = vrot.lane.b32.xlu0 %v1399, 64
    %v1404 = vpop.permute.xlu0 %1403
    %1405 = vrot.lane.b32.xlu0 %v1400, 64
    %v1406 = vpop.permute.xlu0 %1405
    %v1409 = vmul.f32 %v1372, %v1404
    %v1410 = vmul.f32 %v1374, %v1406
    %1412 = vrot.lane.b32.xlu0 %v1409, 32
    %v1413 = vpop.permute.xlu0 %1412
    %1415 = vst.msk [vmem:[%s688] sm:$0xff] %vm398, %v1413
    %1417 = vrot.lane.b32.xlu0 %v1410, 64
    %v1418 = vpop.permute.xlu0 %1417
    %1420 = vst.msk [vmem:[%s682] sm:$0xff] %vm537, %v1418
    %v1421 = vld [vmem:[%s396] sm:$0xff]
    %v1422 = vld [vmem:[%s392 + $0x8] sm:$0xff]
    %1423 = vrot.lane.b32.xlu0 %v1410, 32
    %v1424 = vpop.permute.xlu0 %1423
    %v1425 = vsel %vm398, %v1413, 0
    %v1427 = vsel %vm398, %v1424, 0
    %1429 = vmatprep.subr.mxu0 0.0
    %1430 = vmatpush1.msra.mxu0 0.0
    %1431 = vmatprep.subr.mxu0 0.0
    %1432 = vmatpush1.msra.mxu0 0.0
    %1433 = vmatprep.subr.mxu0 0.0
    %1434 = vmatpush1.msra.mxu0 0.0
    %1435 = vmatprep.subr.mxu0 0.0
    %1436 = vmatpush1.msra.mxu0 0.0
    %1437 = vmatprep.subr.mxu0 0.0
    %1438 = vmatpush1.msra.mxu0 0.0
    %1439 = vmatprep.subr.mxu0 0.0
    %1440 = vmatpush1.msra.mxu0 0.0
    %1441 = vmatprep.subr.mxu0 0.0
    %1442 = vmatpush1.msra.mxu0 0.0
    %1443 = vmatprep.subr.mxu0 0.0
    %1444 = vmatpush1.msra.mxu0 0.0
    %1445 = vmatprep.subr.mxu0 0.0
    %1446 = vmatpush1.msra.mxu0 0.0
    %1447 = vmatprep.subr.mxu0 0.0
    %1448 = vmatpush1.msra.mxu0 0.0
    %1449 = vmatprep.subr.mxu0 0.0
    %1450 = vmatpush1.msra.mxu0 0.0
    %1451 = vmatprep.subr.mxu0 0.0
    %1452 = vmatpush1.msra.mxu0 0.0
    %1453 = vmatprep.subr.mxu0 %v389
    %1454 = vmatpush1.msra.mxu0 %v388
    %1455 = vmatprep.subr.mxu0 %v387
    %1456 = vmatpush1.msra.mxu0 %v386
    %1457 = vmatprep.subr.mxu0 %v385
    %1458 = vmatpush1.msra.mxu0 %v384
    %1459 = vmatprep.subr.mxu0 %v383
    %1460 = vmatpush1.msra.mxu0 %v382
    %1461 = vmatprep.subr.mxu0 0.0
    %1462 = vmatpush2.msra.mxu0 0.0
    %1463 = vmatprep.subr.mxu0 0.0
    %1464 = vmatpush2.msra.mxu0 0.0
    %1465 = vmatprep.subr.mxu0 0.0
    %1466 = vmatpush2.msra.mxu0 0.0
    %1467 = vmatprep.subr.mxu0 0.0
    %1468 = vmatpush2.msra.mxu0 0.0
    %1469 = vmatprep.subr.mxu0 0.0
    %1470 = vmatpush2.msra.mxu0 0.0
    %1471 = vmatprep.subr.mxu0 0.0
    %1472 = vmatpush2.msra.mxu0 0.0
    %1473 = vmatprep.subr.mxu0 0.0
    %1474 = vmatpush2.msra.mxu0 0.0
    %1475 = vmatprep.subr.mxu0 0.0
    %1476 = vmatpush2.msra.mxu0 0.0
    %1477 = vmatprep.subr.mxu0 0.0
    %1478 = vmatpush2.msra.mxu0 0.0
    %1479 = vmatprep.subr.mxu0 0.0
    %1480 = vmatpush2.msra.mxu0 0.0
    %1481 = vmatprep.subr.mxu0 0.0
    %1482 = vmatpush2.msra.mxu0 0.0
    %1483 = vmatprep.subr.mxu0 0.0
    %1484 = vmatpush2.msra.mxu0 0.0
    %1485 = vmatprep.subr.mxu0 0.0
    %1486 = vmatpush2.msra.mxu0 0.0
    %1487 = vmatprep.subr.mxu0 0.0
    %1488 = vmatpush2.msra.mxu0 0.0
    %1489 = vmatprep.subr.mxu0 0.0
    %1490 = vmatpush2.msra.mxu0 0.0
    %1491 = vmatprep.subr.mxu0 0.0
    %1492 = vmatpush2.msra.mxu0 0.0
    %1493 = vmatprep.mubr.f32.mxu0 0.0
    %1494 = vmatmul.mubr.f32.gmra.mxu0 %v1425
    %v1495 = vpop.f32.mrf.mxu0
    %v1496 = vadd.f32 0.0, %v1495
    %v1497 = vpop.f32.mrf.mxu0
    %1498 = vmatprep.mubr.f32.mxu0 0.0
    %1499 = vmatmul.mubr.f32.gmra.mxu0 %v1427
    %v1500 = vpop.f32.mrf.mxu0
    %v1501 = vpop.f32.mrf.mxu0
    %v1502 = vadd.f32 0.0, %v1501
    %1503 = vdwg.mxu0
    %v1504 = vadd.f32 %v1421, %v1496
    %v1505 = vadd.f32 %v1422, %v1502
    %v1506 = vxor.u32 %v1504, 2147483648
    %v1507 = vxor.u32 %v1505, 2147483648
    %v1508 = vmul.f32 %v1506, 1.442695
    %v1509 = vpow.pop %v1508
    %v1510 = vmul.f32 %v1507, 1.442695
    %v1511 = vpow.pop %v1510
    %v1512 = vadd.f32 %v1509, 1.0
    %v1513 = vadd.f32 %v1511, 1.0
    %v1514 = vrcp.pop %v1512
    %v1515 = vmul.f32 1.0, %v1514
    %v1516 = vrcp.pop %v1513
    %v1517 = vmul.f32 1.0, %v1516
    %v1518 = vtanh.pop %v1504
    %v1519 = vtanh.pop %v1505
    %v1520 = vmul.f32 %v1515, %v1397
    %v1521 = vmul.f32 %v1517, %v1398
    %1524 = vrot.lane.b32.xlu0 %v1518, 64
    %v1525 = vpop.permute.xlu0 %1524
    %1526 = vrot.lane.b32.xlu0 %v1519, 64
    %v1527 = vpop.permute.xlu0 %1526
    %v1530 = vmul.f32 %v1515, %v1525
    %v1531 = vmul.f32 %v1517, %v1527
    %1534 = vrot.lane.b32.xlu0 %v1530, 32
    %v1535 = vpop.permute.xlu0 %1534
    %1536 = vrot.lane.b32.xlu0 %v1531, 32
    %v1537 = vpop.permute.xlu0 %1536
    %v1540 = vadd.f32 %v1520, %v1535
    %v1541 = vadd.f32 %v1521, %v1537
    %v1542 = vtanh.pop %v1540
    %v1543 = vtanh.pop %v1541
    %1546 = vrot.lane.b32.xlu0 %v1542, 64
    %v1547 = vpop.permute.xlu0 %1546
    %1548 = vrot.lane.b32.xlu0 %v1543, 64
    %v1549 = vpop.permute.xlu0 %1548
    %v1552 = vmul.f32 %v1515, %v1547
    %v1553 = vmul.f32 %v1517, %v1549
    %1555 = vrot.lane.b32.xlu0 %v1552, 32
    %v1556 = vpop.permute.xlu0 %1555
    %1558 = vst.msk [vmem:[%s536] sm:$0xff] %vm398, %v1556
    %1560 = vrot.lane.b32.xlu0 %v1553, 64
    %v1561 = vpop.permute.xlu0 %1560
    %1563 = vst.msk [vmem:[#allocation3] sm:$0xff] %vm537, %v1561
    %v1564 = vld [vmem:[#allocation3] sm:$0xff]
    %v1565 = vld [vmem:[#allocation3 + $0x8] sm:$0xff]
    %v1566 = vld [vmem:[#allocation3 + $0x10] sm:$0xff]
    %v1567 = vld [vmem:[#allocation3 + $0x18] sm:$0xff]
    %v1568 = vld [vmem:[#allocation3 + $0x20] sm:$0xff]
    %v1569 = vld [vmem:[#allocation3 + $0x28] sm:$0xff]
    %v1570 = vld [vmem:[#allocation3 + $0x30] sm:$0xff]
    %v1571 = vld [vmem:[#allocation3 + $0x38] sm:$0xff]
    %v1572 = vmul.f32 %v1564, %v42
    %v1573 = vmul.f32 %v1565, %v42
    %v1574 = vmul.f32 %v1566, %v42
    %v1575 = vmul.f32 %v1567, %v42
    %v1576 = vmul.f32 %v1568, %v42
    %v1577 = vmul.f32 %v1569, %v42
    %v1578 = vmul.f32 %v1570, %v42
    %v1579 = vmul.f32 %v1571, %v42
    %v1580 = vsel %vm228, %v1572, 0.0
    %1581 = vadd.xlane.f32.xlu0 %v1580
    %v1582 = vpop.xlane.xlu0 %1581
    %v1583 = vsel %vm228, %v1573, 0.0
    %1584 = vadd.xlane.f32.xlu0 %v1583
    %v1585 = vpop.xlane.xlu0 %1584
    %v1586 = vsel %vm228, %v1574, 0.0
    %1587 = vadd.xlane.f32.xlu0 %v1586
    %v1588 = vpop.xlane.xlu0 %1587
    %v1589 = vsel %vm228, %v1575, 0.0
    %1590 = vadd.xlane.f32.xlu0 %v1589
    %v1591 = vpop.xlane.xlu0 %1590
    %v1592 = vsel %vm228, %v1576, 0.0
    %1593 = vadd.xlane.f32.xlu0 %v1592
    %v1594 = vpop.xlane.xlu0 %1593
    %v1595 = vsel %vm228, %v1577, 0.0
    %1596 = vadd.xlane.f32.xlu0 %v1595
    %v1597 = vpop.xlane.xlu0 %1596
    %v1598 = vsel %vm228, %v1578, 0.0
    %1599 = vadd.xlane.f32.xlu0 %v1598
    %v1600 = vpop.xlane.xlu0 %1599
    %v1601 = vsel %vm228, %v1579, 0.0
    %1602 = vadd.xlane.f32.xlu0 %v1601
    %v1603 = vpop.xlane.xlu0 %1602
    %v1604 = vstv %s44
    %v1605 = vadd.f32 %v1582, %v1604
    %v1606 = vadd.f32 %v1585, %v1604
    %v1607 = vadd.f32 %v1588, %v1604
    %v1608 = vadd.f32 %v1591, %v1604
    %v1609 = vadd.f32 %v1594, %v1604
    %v1610 = vadd.f32 %v1597, %v1604
    %v1611 = vadd.f32 %v1600, %v1604
    %v1612 = vadd.f32 %v1603, %v1604
    %v1613 = vmax.f32 %v1605, %v1609
    %v1614 = vmax.f32 %v1606, %v1610
    %v1615 = vmax.f32 %v1607, %v1611
    %v1616 = vmax.f32 %v1608, %v1612
    %v1617 = vmax.f32 %v1613, %v1614
    %v1618 = vmax.f32 %v1615, %v1616
    %v1619 = vmax.f32 %v1617, %v1618
    %v1620 = vsub.f32 %v1605, %v1619
    %v1621 = vsub.f32 %v1606, %v1619
    %v1622 = vsub.f32 %v1607, %v1619
    %v1623 = vsub.f32 %v1608, %v1619
    %v1624 = vsub.f32 %v1609, %v1619
    %v1625 = vsub.f32 %v1610, %v1619
    %v1626 = vsub.f32 %v1611, %v1619
    %v1627 = vsub.f32 %v1612, %v1619
    %v1628 = vmul.f32 %v1620, 1.442695
    %v1629 = vpow.pop %v1628
    %v1630 = vmul.f32 %v1621, 1.442695
    %v1631 = vpow.pop %v1630
    %v1632 = vmul.f32 %v1622, 1.442695
    %v1633 = vpow.pop %v1632
    %v1634 = vmul.f32 %v1623, 1.442695
    %v1635 = vpow.pop %v1634
    %v1636 = vmul.f32 %v1624, 1.442695
    %v1637 = vpow.pop %v1636
    %v1638 = vmul.f32 %v1625, 1.442695
    %v1639 = vpow.pop %v1638
    %v1640 = vmul.f32 %v1626, 1.442695
    %v1641 = vpow.pop %v1640
    %v1642 = vmul.f32 %v1627, 1.442695
    %v1643 = vpow.pop %v1642
    %v1644 = vadd.f32 %v1629, %v1631
    %v1645 = vadd.f32 %v1644, %v1633
    %v1646 = vadd.f32 %v1645, %v1635
    %v1647 = vadd.f32 %v1646, %v1637
    %v1648 = vadd.f32 %v1647, %v1639
    %v1649 = vadd.f32 %v1648, %v1641
    %v1650 = vadd.f32 %v1649, %v1643
    %v1651 = vrcp.pop %v1650
    %v1652 = vmul.f32 %v1629, %v1651
    %v1653 = vmul.f32 %v1631, %v1651
    %v1654 = vmul.f32 %v1633, %v1651
    %v1655 = vmul.f32 %v1635, %v1651
    %v1656 = vmul.f32 %v1637, %v1651
    %v1657 = vmul.f32 %v1639, %v1651
    %v1658 = vmul.f32 %v1641, %v1651
    %v1659 = vmul.f32 %v1643, %v1651
    %v1660 = vmul.f32 %v1564, %v1652
    %v1661 = vmul.f32 %v1565, %v1653
    %v1662 = vmul.f32 %v1566, %v1654
    %v1663 = vmul.f32 %v1567, %v1655
    %v1664 = vmul.f32 %v1568, %v1656
    %v1665 = vmul.f32 %v1569, %v1657
    %v1666 = vmul.f32 %v1570, %v1658
    %v1667 = vmul.f32 %v1571, %v1659
    %v1668 = vsel %vm228, %v1660, 0.0
    %v1669 = vsel %vm228, %v1661, 0.0
    %v1670 = vadd.f32 %v1668, %v1669
    %v1671 = vsel %vm228, %v1662, 0.0
    %v1672 = vadd.f32 %v1670, %v1671
    %v1673 = vsel %vm228, %v1663, 0.0
    %v1674 = vadd.f32 %v1672, %v1673
    %v1675 = vsel %vm228, %v1664, 0.0
    %v1676 = vadd.f32 %v1674, %v1675
    %v1677 = vsel %vm228, %v1665, 0.0
    %v1678 = vadd.f32 %v1676, %v1677
    %v1679 = vsel %vm228, %v1666, 0.0
    %v1680 = vadd.f32 %v1678, %v1679
    %v1681 = vsel %vm228, %v1667, 0.0
    %v1682 = vadd.f32 %v1680, %v1681
    %v1683 = vmul.f32 %v1682, %v45
    %v1684 = vadd.f32 %v1683, %v46
    %v1685 = vld [vmem:[%s4] sm:$0xff]
    %v1686 = vld [vmem:[%s4 + $0x8] sm:$0xff]
    %v1687 = vld [vmem:[%s4 + $0x10] sm:$0xff]
    %v1688 = vld [vmem:[%s4 + $0x18] sm:$0xff]
    %v1689 = vld [vmem:[%s4 + $0x20] sm:$0xff]
    %v1690 = vld [vmem:[%s4 + $0x28] sm:$0xff]
    %v1691 = vld [vmem:[%s4 + $0x30] sm:$0xff]
    %v1692 = vld [vmem:[%s4 + $0x38] sm:$0xff]
    %v1694 = vsel %vm228, %v1684, 0
    %1696 = vmatprep.subr.mxu0 0.0
    %1697 = vmatpush1.msra.mxu0 0.0
    %1698 = vmatprep.subr.mxu0 0.0
    %1699 = vmatpush1.msra.mxu0 0.0
    %1700 = vmatprep.subr.mxu0 0.0
    %1701 = vmatpush1.msra.mxu0 0.0
    %1702 = vmatprep.subr.mxu0 0.0
    %1703 = vmatpush1.msra.mxu0 0.0
    %1704 = vmatprep.subr.mxu0 0.0
    %1705 = vmatpush1.msra.mxu0 0.0
    %1706 = vmatprep.subr.mxu0 0.0
    %1707 = vmatpush1.msra.mxu0 0.0
    %1708 = vmatprep.subr.mxu0 0.0
    %1709 = vmatpush1.msra.mxu0 0.0
    %1710 = vmatprep.subr.mxu0 0.0
    %1711 = vmatpush1.msra.mxu0 0.0
    %1712 = vmatprep.subr.mxu0 0.0
    %1713 = vmatpush1.msra.mxu0 %v1692
    %1714 = vmatprep.subr.mxu0 0.0
    %1715 = vmatpush1.msra.mxu0 %v1691
    %1716 = vmatprep.subr.mxu0 0.0
    %1717 = vmatpush1.msra.mxu0 %v1690
    %1718 = vmatprep.subr.mxu0 0.0
    %1719 = vmatpush1.msra.mxu0 %v1689
    %1720 = vmatprep.subr.mxu0 0.0
    %1721 = vmatpush1.msra.mxu0 %v1688
    %1722 = vmatprep.subr.mxu0 0.0
    %1723 = vmatpush1.msra.mxu0 %v1687
    %1724 = vmatprep.subr.mxu0 0.0
    %1725 = vmatpush1.msra.mxu0 %v1686
    %1726 = vmatprep.subr.mxu0 0.0
    %1727 = vmatpush1.msra.mxu0 %v1685
    %1728 = vmatprep.subr.mxu0 0.0
    %1729 = vmatpush2.msra.mxu0 0.0
    %1730 = vmatprep.subr.mxu0 0.0
    %1731 = vmatpush2.msra.mxu0 0.0
    %1732 = vmatprep.subr.mxu0 0.0
    %1733 = vmatpush2.msra.mxu0 0.0
    %1734 = vmatprep.subr.mxu0 0.0
    %1735 = vmatpush2.msra.mxu0 0.0
    %1736 = vmatprep.subr.mxu0 0.0
    %1737 = vmatpush2.msra.mxu0 0.0
    %1738 = vmatprep.subr.mxu0 0.0
    %1739 = vmatpush2.msra.mxu0 0.0
    %1740 = vmatprep.subr.mxu0 0.0
    %1741 = vmatpush2.msra.mxu0 0.0
    %1742 = vmatprep.subr.mxu0 0.0
    %1743 = vmatpush2.msra.mxu0 0.0
    %1744 = vmatprep.subr.mxu0 0.0
    %1745 = vmatpush2.msra.mxu0 0.0
    %1746 = vmatprep.subr.mxu0 0.0
    %1747 = vmatpush2.msra.mxu0 0.0
    %1748 = vmatprep.subr.mxu0 0.0
    %1749 = vmatpush2.msra.mxu0 0.0
    %1750 = vmatprep.subr.mxu0 0.0
    %1751 = vmatpush2.msra.mxu0 0.0
    %1752 = vmatprep.subr.mxu0 0.0
    %1753 = vmatpush2.msra.mxu0 0.0
    %1754 = vmatprep.subr.mxu0 0.0
    %1755 = vmatpush2.msra.mxu0 0.0
    %1756 = vmatprep.subr.mxu0 0.0
    %1757 = vmatpush2.msra.mxu0 0.0
    %1758 = vmatprep.subr.mxu0 0.0
    %1759 = vmatpush2.msra.mxu0 0.0
    %1760 = vmatprep.mubr.f32.mxu0 0.0
    %1761 = vmatmul.mubr.f32.gmra.mxu0 %v1694
    %v1762 = vpop.f32.mrf.mxu0
    %v1763 = vadd.f32 %v47, %v1762
    %v1764 = vpop.f32.mrf.mxu0
    %1765 = vdwg.mxu0
    %vm1766 = vcmask 15360
    %1767 = vst.msk [vmem:[%s6] sm:$0xff] %vm1766, %v1763
    // Predicated region
    $region30: #{tpu_custom_call.1} parent=1 // pred_check
      _
    $region31: #{tpu_custom_call.1} parent=1 // pred_check_branch
      %1769 = sbr.rel (0) target = $region33
    $region32: #{tpu_custom_call.1} parent=1 // pred_region
      _
    $region33: #{tpu_custom_call.1} parent=1 // pred_fallthru
      _
    // Predicated region
    $region34: #{tpu_custom_call.1} parent=1 // pred_check
      _
    $region35: #{tpu_custom_call.1} parent=1 // pred_check_branch
      %1771 = sbr.rel (0) target = $region37
    $region36: #{tpu_custom_call.1} parent=1 // pred_region
      _
    $region37: #{tpu_custom_call.1} parent=1 // pred_fallthru
      _
    %1772 = vsyncpa [#allocation5], 1

</llo_original>
